<compile_context>
chip_gen: v7x
topology: tpu7x:2x2x1
jax: 0.10.0
libtpu: 0.0.40
codegen_flags: <defaults>
</compile_context>

<pallas_src>
import functools
import math

import jax
import jax.numpy as jnp
from jax.experimental import pallas as pl
from jax.experimental.pallas import tpu as pltpu

# ----------------------------- configuration -----------------------------
B = 2          # batch
L = 16         # sequence length
D = 16         # d_model (width)
H = 1          # n_head (kernel specialized to 1, see header)
LAYERS = 2     # number of residual attention blocks
NEG_BIAS = -1e30


# ----------------------------- per-(batch, layer) kernel -----------------------------
def _layer_kernel(x_ref, mask_ref,
                  ln1_g_ref, ln1_b_ref, in_w_ref, in_b_ref,
                  out_w_ref, out_b_ref,
                  ln2_g_ref, ln2_b_ref, fc_w_ref, fc_b_ref,
                  proj_w_ref, proj_b_ref,
                  o_ref, act_ref, *, heads):
    ly = pl.program_id(1)                      # layer index ("arbitrary" axis)
    n_layers = pl.num_programs(1)
    l, d = act_ref.shape
    scale = 1.0 / math.sqrt(d // heads)

    @pl.when(ly == 0)
    def _():                                    # load this batch row's residual stream
        act_ref[...] = x_ref[...]

    x = act_ref[...]                            # (L, D) residual stream
    key_bias = mask_ref[...] * NEG_BIAS         # (1, L) additive key-padding bias

    def layer_norm(t, g, beta):                 # eps=1e-5, f32 (as reference LayerNorm)
        mu = jnp.mean(t, axis=-1, keepdims=True)
        tc = t - mu
        var = jnp.mean(tc * tc, axis=-1, keepdims=True)
        return tc * jax.lax.rsqrt(var + 1e-5) * g + beta

    # ---- attention branch: x + softmax(head_w) * MHA(ln_1(x)); gate == 1 for H == 1 ----
    h = layer_norm(x, ln1_g_ref[...], ln1_b_ref[...])
    qkv = jnp.dot(h, in_w_ref[...],
                  preferred_element_type=jnp.float32) + in_b_ref[...]      # (L, 3D)
    q = qkv[:, :d]
    k = qkv[:, d:2 * d]
    v = qkv[:, 2 * d:]
    s = jnp.einsum('qc,kc->qk', q, k,
                   preferred_element_type=jnp.float32) * scale + key_bias  # (L, L)
    s = s - jnp.max(s, axis=-1, keepdims=True)
    e = jnp.exp(s)
    p = e * pl.reciprocal(jnp.sum(e, axis=-1, keepdims=True), approx=False)
    ao = jnp.dot(p, v, preferred_element_type=jnp.float32)                 # (L, D)
    ao = jnp.dot(ao, out_w_ref[...],
                 preferred_element_type=jnp.float32) + out_b_ref[...]
    x = x + ao                                   # attn dropout(0.1): eval-mode identity

    # ---- MLP branch: x + c_proj(QuickGELU(c_fc(ln_2(x)))) ----
    h2 = layer_norm(x, ln2_g_ref[...], ln2_b_ref[...])
    m = jnp.dot(h2, fc_w_ref[...],
                preferred_element_type=jnp.float32) + fc_b_ref[...]        # (L, 4D)
    m = m * jax.nn.sigmoid(1.702 * m)            # QuickGELU
    m = jnp.dot(m, proj_w_ref[...],
                preferred_element_type=jnp.float32) + proj_b_ref[...]      # (L, D)
    x = x + m                                    # mlp dropout(0.1): eval-mode identity

    act_ref[...] = x                             # carry residual stream to next layer

    @pl.when(ly == n_layers - 1)
    def _():                                     # finalize: store this batch row
        o_ref[...] = x


# ----------------------------- wrapper -----------------------------
def transformer_forward(params, x_lbd, padding_mask):
    """x_lbd: (L, B, D) as in nn.MultiheadAttention; padding_mask: (B, L), 1.0 = padded key.
    Returns (y_lbd, padding_mask), mirroring the reference block's (x, padding_mask) tuple."""
    assert H == 1, "kernel is specialized to n_head == 1 (see header TODO)"
    x_bld = jnp.transpose(x_lbd.astype(jnp.float32), (1, 0, 2))            # layout plumbing only
    mask = padding_mask.astype(jnp.float32).reshape(B, 1, L)

    vmem = pltpu.MemorySpace.VMEM

    def wspec(r, c):  # per-layer weight block: (None, r, c), indexed by the layer axis
        return pl.BlockSpec((None, r, c), lambda b, ly: (ly, 0, 0), memory_space=vmem)

    grid_spec = pltpu.PrefetchScalarGridSpec(
        num_scalar_prefetch=0,
        grid=(B, LAYERS),
        in_specs=[
            pl.BlockSpec((None, L, D), lambda b, ly: (b, 0, 0), memory_space=vmem),  # x
            pl.BlockSpec((None, 1, L), lambda b, ly: (b, 0, 0), memory_space=vmem),  # mask
            wspec(1, D), wspec(1, D),            # ln1_g, ln1_b
            wspec(D, 3 * D), wspec(1, 3 * D),    # attn in_proj  w, b
            wspec(D, D), wspec(1, D),            # attn out_proj w, b
            wspec(1, D), wspec(1, D),            # ln2_g, ln2_b
            wspec(D, 4 * D), wspec(1, 4 * D),    # mlp c_fc   w, b
            wspec(4 * D, D), wspec(1, D),        # mlp c_proj w, b
        ],
        out_specs=pl.BlockSpec((None, L, D), lambda b, ly: (b, 0, 0), memory_space=vmem),
        scratch_shapes=[pltpu.VMEM((L, D), jnp.float32)],   # residual-stream carry
    )

    y_bld = pl.pallas_call(
        functools.partial(_layer_kernel, heads=H),
        out_shape=jax.ShapeDtypeStruct((B, L, D), jnp.float32),
        grid_spec=grid_spec,
        compiler_params=pltpu.CompilerParams(
            dimension_semantics=("parallel", "arbitrary"),   # batch parallel, layers sequential
            vmem_limit_bytes=32 * 1024 * 1024,
        ),
    )(x_bld, mask,
      params["ln1_g"], params["ln1_b"], params["in_w"], params["in_b"],
      params["out_w"], params["out_b"],
      params["ln2_g"], params["ln2_b"], params["fc_w"], params["fc_b"],
      params["proj_w"], params["proj_b"])

    return jnp.transpose(y_bld, (1, 0, 2)), padding_mask


# ----------------------------- parameters -----------------------------
def init_params(key):
    keys = iter(jax.random.split(key, 8))

    def nrm(shape, std=0.02):
        return std * jax.random.normal(next(keys), shape, dtype=jnp.float32)

    return dict(
        ln1_g=jnp.ones((LAYERS, 1, D), jnp.float32),
        ln1_b=jnp.zeros((LAYERS, 1, D), jnp.float32),
        in_w=nrm((LAYERS, D, 3 * D)),                  # MHA in_proj (merged q/k/v)
        in_b=jnp.zeros((LAYERS, 1, 3 * D), jnp.float32),
        out_w=nrm((LAYERS, D, D)),                     # MHA out_proj
        out_b=jnp.zeros((LAYERS, 1, D), jnp.float32),
        # nn.Parameter(torch.ones(n_head)): with n_head == 1, softmax == 1.0 exactly,
        # so the gate is an identity and is not passed to the kernel.
        head_w=jnp.ones((LAYERS, 1, H), jnp.float32),
        ln2_g=jnp.ones((LAYERS, 1, D), jnp.float32),
        ln2_b=jnp.zeros((LAYERS, 1, D), jnp.float32),
        fc_w=nrm((LAYERS, D, 4 * D)),                  # mlp c_fc
        fc_b=jnp.zeros((LAYERS, 1, 4 * D), jnp.float32),
        proj_w=nrm((LAYERS, 4 * D, D)),                # mlp c_proj
        proj_b=jnp.zeros((LAYERS, 1, D), jnp.float32),
    )


# ----------------------------- main -----------------------------
if __name__ == "__main__":
    key = jax.random.PRNGKey(0)
    kp, kx = jax.random.split(key)
    params = init_params(kp)
    x = jax.random.normal(kx, (L, B, D), dtype=jnp.float32)      # (seq, batch, d_model)
    padding_mask = jnp.zeros((B, L), dtype=jnp.float32)          # no padded keys

    fwd = jax.jit(transformer_forward)
    y, mask_out = fwd(params, x, padding_mask)
    jax.block_until_ready(y)

    assert y.shape == (L, B, D)
    assert bool(jnp.all(jnp.isfinite(y)))
    print("KERNEL_OK")
</pallas_src>

<mosaic_0001>
module attributes {stable_mosaic.version = 11 : i64} {
  func.func @_layer_kernel(%arg0: i32, %arg1: i32, %arg2: memref<1x16x16xf32, #tpu.memory_space<vmem>>, %arg3: memref<1x1x16xf32, #tpu.memory_space<vmem>>, %arg4: memref<1x1x16xf32, #tpu.memory_space<vmem>>, %arg5: memref<1x1x16xf32, #tpu.memory_space<vmem>>, %arg6: memref<1x16x48xf32, #tpu.memory_space<vmem>>, %arg7: memref<1x1x48xf32, #tpu.memory_space<vmem>>, %arg8: memref<1x16x16xf32, #tpu.memory_space<vmem>>, %arg9: memref<1x1x16xf32, #tpu.memory_space<vmem>>, %arg10: memref<1x1x16xf32, #tpu.memory_space<vmem>>, %arg11: memref<1x1x16xf32, #tpu.memory_space<vmem>>, %arg12: memref<1x16x64xf32, #tpu.memory_space<vmem>>, %arg13: memref<1x1x64xf32, #tpu.memory_space<vmem>>, %arg14: memref<1x64x16xf32, #tpu.memory_space<vmem>>, %arg15: memref<1x1x16xf32, #tpu.memory_space<vmem>>, %arg16: memref<1x16x16xf32, #tpu.memory_space<vmem>>, %arg17: memref<16x16xf32, #tpu.memory_space<vmem>>) attributes {dimension_semantics = [#tpu.dimension_semantics<parallel>, #tpu.dimension_semantics<arbitrary>], iteration_bounds = array<i64: 2, 2>, scalar_prefetch = 0 : i64, scratch_operands = 1 : i64, tpu.core_type = #tpu.core_type<tc>, window_params = [{transform_indices = @transform_0, window_bounds = array<i64: 1, 16, 16>}, {transform_indices = @transform_1, window_bounds = array<i64: 1, 1, 16>}, {transform_indices = @transform_2, window_bounds = array<i64: 1, 1, 16>}, {transform_indices = @transform_3, window_bounds = array<i64: 1, 1, 16>}, {transform_indices = @transform_4, window_bounds = array<i64: 1, 16, 48>}, {transform_indices = @transform_5, window_bounds = array<i64: 1, 1, 48>}, {transform_indices = @transform_6, window_bounds = array<i64: 1, 16, 16>}, {transform_indices = @transform_7, window_bounds = array<i64: 1, 1, 16>}, {transform_indices = @transform_8, window_bounds = array<i64: 1, 1, 16>}, {transform_indices = @transform_9, window_bounds = array<i64: 1, 1, 16>}, {transform_indices = @transform_10, window_bounds = array<i64: 1, 16, 64>}, {transform_indices = @transform_11, window_bounds = array<i64: 1, 1, 64>}, {transform_indices = @transform_12, window_bounds = array<i64: 1, 64, 16>}, {transform_indices = @transform_13, window_bounds = array<i64: 1, 1, 16>}, {transform_indices = @transform_14, window_bounds = array<i64: 1, 16, 16>}]} {
    %c0_i32 = arith.constant 0 : i32
    %0 = arith.cmpi eq, %arg1, %c0_i32 : i32
    %1 = arith.extui %0 : i1 to i32
    %c0_i32_0 = arith.constant 0 : i32
    %2 = arith.cmpi ne, %1, %c0_i32_0 : i32
    scf.if %2 {
      %c0_65 = arith.constant 0 : index
      %c0_66 = arith.constant 0 : index
      %c0_67 = arith.constant 0 : index
      %117 = vector.load %arg2[%c0_65, %c0_66, %c0_67] : memref<1x16x16xf32, #tpu.memory_space<vmem>>, vector<1x16x16xf32>
      %118 = vector.shape_cast %117 : vector<1x16x16xf32> to vector<16x16xf32>
      %c0_68 = arith.constant 0 : index
      %c0_69 = arith.constant 0 : index
      %119 = vector.load %arg17[%c0_68, %c0_69] : memref<16x16xf32, #tpu.memory_space<vmem>>, vector<16x16xf32>
      tpu.vector_store %arg17[%c0_68, %c0_69], %118 {strides = array<i32>} : memref<16x16xf32, #tpu.memory_space<vmem>>, vector<16x16xf32>,
    } else {
    }
    %c0 = arith.constant 0 : index
    %c0_1 = arith.constant 0 : index
    %3 = vector.load %arg17[%c0, %c0_1] : memref<16x16xf32, #tpu.memory_space<vmem>>, vector<16x16xf32>
    %c0_2 = arith.constant 0 : index
    %c0_3 = arith.constant 0 : index
    %c0_4 = arith.constant 0 : index
    %4 = vector.load %arg3[%c0_2, %c0_3, %c0_4] : memref<1x1x16xf32, #tpu.memory_space<vmem>>, vector<1x1x16xf32>
    %5 = vector.shape_cast %4 : vector<1x1x16xf32> to vector<1x16xf32>
    %cst = arith.constant -1.000000e+30 : f32
    %6 = vector.broadcast %cst : f32 to vector<1x16xf32>
    %7 = arith.mulf %5, %6 : vector<1x16xf32>
    %c0_5 = arith.constant 0 : index
    %c0_6 = arith.constant 0 : index
    %c0_7 = arith.constant 0 : index
    %8 = vector.load %arg4[%c0_5, %c0_6, %c0_7] : memref<1x1x16xf32, #tpu.memory_space<vmem>>, vector<1x1x16xf32>
    %9 = vector.shape_cast %8 : vector<1x1x16xf32> to vector<1x16xf32>
    %c0_8 = arith.constant 0 : index
    %c0_9 = arith.constant 0 : index
    %c0_10 = arith.constant 0 : index
    %10 = vector.load %arg5[%c0_8, %c0_9, %c0_10] : memref<1x1x16xf32, #tpu.memory_space<vmem>>, vector<1x1x16xf32>
    %11 = vector.shape_cast %10 : vector<1x1x16xf32> to vector<1x16xf32>
    %cst_11 = arith.constant dense<0.000000e+00> : vector<16xf32>
    %12 = vector.multi_reduction <add>, %3, %cst_11 [1] : vector<16x16xf32> to vector<16xf32>
    %13 = vector.shape_cast %12 : vector<16xf32> to vector<16x1xf32>
    %cst_12 = arith.constant 1.600000e+01 : f32
    %14 = vector.broadcast %cst_12 : f32 to vector<16x1xf32>
    %15 = arith.divf %13, %14 : vector<16x1xf32>
    %16 = vector.broadcast %15 : vector<16x1xf32> to vector<16x16xf32>
    %17 = arith.subf %3, %16 : vector<16x16xf32>
    %18 = arith.mulf %17, %17 : vector<16x16xf32>
    %cst_13 = arith.constant dense<0.000000e+00> : vector<16xf32>
    %19 = vector.multi_reduction <add>, %18, %cst_13 [1] : vector<16x16xf32> to vector<16xf32>
    %20 = vector.shape_cast %19 : vector<16xf32> to vector<16x1xf32>
    %cst_14 = arith.constant 1.600000e+01 : f32
    %21 = vector.broadcast %cst_14 : f32 to vector<16x1xf32>
    %22 = arith.divf %20, %21 : vector<16x1xf32>
    %cst_15 = arith.constant 9.99999974E-6 : f32
    %23 = vector.broadcast %cst_15 : f32 to vector<16x1xf32>
    %24 = arith.addf %22, %23 : vector<16x1xf32>
    %25 = math.rsqrt %24 : vector<16x1xf32>
    %26 = vector.broadcast %25 : vector<16x1xf32> to vector<16x16xf32>
    %27 = arith.mulf %17, %26 : vector<16x16xf32>
    %28 = vector.broadcast %9 : vector<1x16xf32> to vector<16x16xf32>
    %29 = arith.mulf %27, %28 : vector<16x16xf32>
    %30 = vector.broadcast %11 : vector<1x16xf32> to vector<16x16xf32>
    %31 = arith.addf %29, %30 : vector<16x16xf32>
    %c0_16 = arith.constant 0 : index
    %c0_17 = arith.constant 0 : index
    %c0_18 = arith.constant 0 : index
    %32 = vector.load %arg6[%c0_16, %c0_17, %c0_18] : memref<1x16x48xf32, #tpu.memory_space<vmem>>, vector<1x16x48xf32>
    %33 = vector.shape_cast %32 : vector<1x16x48xf32> to vector<16x48xf32>
    %cst_19 = arith.constant dense<0.000000e+00> : vector<16x48xf32>
    %34 = tpu.matmul %31, %33, %cst_19 {dimension_numbers = #tpu.dot_dimension_numbers<[1], [0], [0], [1], [0, 0, 1, 1], [], []>} : vector<16x16xf32>, vector<16x48xf32>, vector<16x48xf32> -> vector<16x48xf32>
    %c0_20 = arith.constant 0 : index
    %c0_21 = arith.constant 0 : index
    %c0_22 = arith.constant 0 : index
    %35 = vector.load %arg7[%c0_20, %c0_21, %c0_22] : memref<1x1x48xf32, #tpu.memory_space<vmem>>, vector<1x1x48xf32>
    %36 = vector.shape_cast %35 : vector<1x1x48xf32> to vector<1x48xf32>
    %37 = vector.broadcast %36 : vector<1x48xf32> to vector<16x48xf32>
    %38 = arith.addf %34, %37 : vector<16x48xf32>
    %39 = vector.extract_strided_slice %38 {offsets = [0, 0], sizes = [16, 16], strides = [1, 1]} : vector<16x48xf32> to vector<16x16xf32>
    %40 = vector.extract_strided_slice %38 {offsets = [0, 16], sizes = [16, 16], strides = [1, 1]} : vector<16x48xf32> to vector<16x16xf32>
    %41 = vector.extract_strided_slice %38 {offsets = [0, 32], sizes = [16, 16], strides = [1, 1]} : vector<16x48xf32> to vector<16x16xf32>
    "tpu.trace_start"() <{level = 10 : i32, message = "qc,kc->qk"}> : () -> ()
    %cst_23 = arith.constant dense<0.000000e+00> : vector<16x16xf32>
    %42 = tpu.matmul %39, %40, %cst_23 {dimension_numbers = #tpu.dot_dimension_numbers<[1], [1], [0], [0], [0, 0, 1, 0], [], []>} : vector<16x16xf32>, vector<16x16xf32>, vector<16x16xf32> -> vector<16x16xf32>
    "tpu.trace_stop"() : () -> ()
    %cst_24 = arith.constant 2.500000e-01 : f32
    %43 = vector.broadcast %cst_24 : f32 to vector<16x16xf32>
    %44 = arith.mulf %42, %43 : vector<16x16xf32>
    %45 = vector.broadcast %7 : vector<1x16xf32> to vector<16x16xf32>
    %46 = arith.addf %44, %45 : vector<16x16xf32>
    %cst_25 = arith.constant dense<0xFF800000> : vector<16xf32>
    %47 = vector.multi_reduction <maximumf>, %46, %cst_25 [1] : vector<16x16xf32> to vector<16xf32>
    %48 = vector.shape_cast %47 : vector<16xf32> to vector<16x1xf32>
    %49 = vector.broadcast %48 : vector<16x1xf32> to vector<16x16xf32>
    %50 = arith.subf %46, %49 : vector<16x16xf32>
    %51 = math.exp %50 : vector<16x16xf32>
    %cst_26 = arith.constant dense<0.000000e+00> : vector<16xf32>
    %52 = vector.multi_reduction <add>, %51, %cst_26 [1] : vector<16x16xf32> to vector<16xf32>
    %53 = vector.shape_cast %52 : vector<16xf32> to vector<16x1xf32>
    %54 = tpu.reciprocal %53 : vector<16x1xf32> -> vector<16x1xf32>
    %55 = vector.broadcast %54 : vector<16x1xf32> to vector<16x16xf32>
    %56 = arith.mulf %51, %55 : vector<16x16xf32>
    %cst_27 = arith.constant dense<0.000000e+00> : vector<16x16xf32>
    %57 = tpu.matmul %56, %41, %cst_27 {dimension_numbers = #tpu.dot_dimension_numbers<[1], [0], [0], [1], [0, 0, 1, 1], [], []>} : vector<16x16xf32>, vector<16x16xf32>, vector<16x16xf32> -> vector<16x16xf32>
    %c0_28 = arith.constant 0 : index
    %c0_29 = arith.constant 0 : index
    %c0_30 = arith.constant 0 : index
    %58 = vector.load %arg8[%c0_28, %c0_29, %c0_30] : memref<1x16x16xf32, #tpu.memory_space<vmem>>, vector<1x16x16xf32>
    %59 = vector.shape_cast %58 : vector<1x16x16xf32> to vector<16x16xf32>
    %cst_31 = arith.constant dense<0.000000e+00> : vector<16x16xf32>
    %60 = tpu.matmul %57, %59, %cst_31 {dimension_numbers = #tpu.dot_dimension_numbers<[1], [0], [0], [1], [0, 0, 1, 1], [], []>} : vector<16x16xf32>, vector<16x16xf32>, vector<16x16xf32> -> vector<16x16xf32>
    %c0_32 = arith.constant 0 : index
    %c0_33 = arith.constant 0 : index
    %c0_34 = arith.constant 0 : index
    %61 = vector.load %arg9[%c0_32, %c0_33, %c0_34] : memref<1x1x16xf32, #tpu.memory_space<vmem>>, vector<1x1x16xf32>
    %62 = vector.shape_cast %61 : vector<1x1x16xf32> to vector<1x16xf32>
    %63 = vector.broadcast %62 : vector<1x16xf32> to vector<16x16xf32>
    %64 = arith.addf %60, %63 : vector<16x16xf32>
    %65 = arith.addf %3, %64 : vector<16x16xf32>
    %c0_35 = arith.constant 0 : index
    %c0_36 = arith.constant 0 : index
    %c0_37 = arith.constant 0 : index
    %66 = vector.load %arg10[%c0_35, %c0_36, %c0_37] : memref<1x1x16xf32, #tpu.memory_space<vmem>>, vector<1x1x16xf32>
    %67 = vector.shape_cast %66 : vector<1x1x16xf32> to vector<1x16xf32>
    %c0_38 = arith.constant 0 : index
    %c0_39 = arith.constant 0 : index
    %c0_40 = arith.constant 0 : index
    %68 = vector.load %arg11[%c0_38, %c0_39, %c0_40] : memref<1x1x16xf32, #tpu.memory_space<vmem>>, vector<1x1x16xf32>
    %69 = vector.shape_cast %68 : vector<1x1x16xf32> to vector<1x16xf32>
    %cst_41 = arith.constant dense<0.000000e+00> : vector<16xf32>
    %70 = vector.multi_reduction <add>, %65, %cst_41 [1] : vector<16x16xf32> to vector<16xf32>
    %71 = vector.shape_cast %70 : vector<16xf32> to vector<16x1xf32>
    %cst_42 = arith.constant 1.600000e+01 : f32
    %72 = vector.broadcast %cst_42 : f32 to vector<16x1xf32>
    %73 = arith.divf %71, %72 : vector<16x1xf32>
    %74 = vector.broadcast %73 : vector<16x1xf32> to vector<16x16xf32>
    %75 = arith.subf %65, %74 : vector<16x16xf32>
    %76 = arith.mulf %75, %75 : vector<16x16xf32>
    %cst_43 = arith.constant dense<0.000000e+00> : vector<16xf32>
    %77 = vector.multi_reduction <add>, %76, %cst_43 [1] : vector<16x16xf32> to vector<16xf32>
    %78 = vector.shape_cast %77 : vector<16xf32> to vector<16x1xf32>
    %cst_44 = arith.constant 1.600000e+01 : f32
    %79 = vector.broadcast %cst_44 : f32 to vector<16x1xf32>
    %80 = arith.divf %78, %79 : vector<16x1xf32>
    %cst_45 = arith.constant 9.99999974E-6 : f32
    %81 = vector.broadcast %cst_45 : f32 to vector<16x1xf32>
    %82 = arith.addf %80, %81 : vector<16x1xf32>
    %83 = math.rsqrt %82 : vector<16x1xf32>
    %84 = vector.broadcast %83 : vector<16x1xf32> to vector<16x16xf32>
    %85 = arith.mulf %75, %84 : vector<16x16xf32>
    %86 = vector.broadcast %67 : vector<1x16xf32> to vector<16x16xf32>
    %87 = arith.mulf %85, %86 : vector<16x16xf32>
    %88 = vector.broadcast %69 : vector<1x16xf32> to vector<16x16xf32>
    %89 = arith.addf %87, %88 : vector<16x16xf32>
    %c0_46 = arith.constant 0 : index
    %c0_47 = arith.constant 0 : index
    %c0_48 = arith.constant 0 : index
    %90 = vector.load %arg12[%c0_46, %c0_47, %c0_48] : memref<1x16x64xf32, #tpu.memory_space<vmem>>, vector<1x16x64xf32>
    %91 = vector.shape_cast %90 : vector<1x16x64xf32> to vector<16x64xf32>
    %cst_49 = arith.constant dense<0.000000e+00> : vector<16x64xf32>
    %92 = tpu.matmul %89, %91, %cst_49 {dimension_numbers = #tpu.dot_dimension_numbers<[1], [0], [0], [1], [0, 0, 1, 1], [], []>} : vector<16x16xf32>, vector<16x64xf32>, vector<16x64xf32> -> vector<16x64xf32>
    %c0_50 = arith.constant 0 : index
    %c0_51 = arith.constant 0 : index
    %c0_52 = arith.constant 0 : index
    %93 = vector.load %arg13[%c0_50, %c0_51, %c0_52] : memref<1x1x64xf32, #tpu.memory_space<vmem>>, vector<1x1x64xf32>
    %94 = vector.shape_cast %93 : vector<1x1x64xf32> to vector<1x64xf32>
    %95 = vector.broadcast %94 : vector<1x64xf32> to vector<16x64xf32>
    %96 = arith.addf %92, %95 : vector<16x64xf32>
    %cst_53 = arith.constant 1.702000e+00 : f32
    %97 = vector.broadcast %cst_53 : f32 to vector<16x64xf32>
    %98 = arith.mulf %97, %96 : vector<16x64xf32>
    %99 = arith.negf %98 : vector<16x64xf32>
    %100 = math.exp %99 : vector<16x64xf32>
    %cst_54 = arith.constant 1.000000e+00 : f32
    %101 = vector.broadcast %cst_54 : f32 to vector<16x64xf32>
    %102 = arith.addf %101, %100 : vector<16x64xf32>
    %103 = arith.divf %101, %102 : vector<16x64xf32>
    %104 = arith.mulf %96, %103 : vector<16x64xf32>
    %c0_55 = arith.constant 0 : index
    %c0_56 = arith.constant 0 : index
    %c0_57 = arith.constant 0 : index
    %105 = vector.load %arg14[%c0_55, %c0_56, %c0_57] : memref<1x64x16xf32, #tpu.memory_space<vmem>>, vector<1x64x16xf32>
    %106 = vector.shape_cast %105 : vector<1x64x16xf32> to vector<64x16xf32>
    %cst_58 = arith.constant dense<0.000000e+00> : vector<16x16xf32>
    %107 = tpu.matmul %104, %106, %cst_58 {dimension_numbers = #tpu.dot_dimension_numbers<[1], [0], [0], [1], [0, 0, 1, 1], [], []>} : vector<16x64xf32>, vector<64x16xf32>, vector<16x16xf32> -> vector<16x16xf32>
    %c0_59 = arith.constant 0 : index
    %c0_60 = arith.constant 0 : index
    %c0_61 = arith.constant 0 : index
    %108 = vector.load %arg15[%c0_59, %c0_60, %c0_61] : memref<1x1x16xf32, #tpu.memory_space<vmem>>, vector<1x1x16xf32>
    %109 = vector.shape_cast %108 : vector<1x1x16xf32> to vector<1x16xf32>
    %110 = vector.broadcast %109 : vector<1x16xf32> to vector<16x16xf32>
    %111 = arith.addf %107, %110 : vector<16x16xf32>
    %112 = arith.addf %65, %111 : vector<16x16xf32>
    %c0_62 = arith.constant 0 : index
    %c0_63 = arith.constant 0 : index
    %113 = vector.load %arg17[%c0_62, %c0_63] : memref<16x16xf32, #tpu.memory_space<vmem>>, vector<16x16xf32>
    tpu.vector_store %arg17[%c0_62, %c0_63], %112 {strides = array<i32>} : memref<16x16xf32, #tpu.memory_space<vmem>>, vector<16x16xf32>,
    %c1_i32 = arith.constant 1 : i32
    %114 = arith.cmpi eq, %arg1, %c1_i32 : i32
    %115 = arith.extui %114 : i1 to i32
    %c0_i32_64 = arith.constant 0 : i32
    %116 = arith.cmpi ne, %115, %c0_i32_64 : i32
    scf.if %116 {
      %c0_65 = arith.constant 0 : index
      %c0_66 = arith.constant 0 : index
      %c0_67 = arith.constant 0 : index
      %117 = vector.load %arg16[%c0_65, %c0_66, %c0_67] : memref<1x16x16xf32, #tpu.memory_space<vmem>>, vector<1x16x16xf32>
      %118 = vector.shape_cast %117 : vector<1x16x16xf32> to vector<16x16xf32>
      %119 = vector.shape_cast %112 : vector<16x16xf32> to vector<1x16x16xf32>
      tpu.vector_store %arg16[%c0_65, %c0_66, %c0_67], %119 {strides = array<i32>} : memref<1x16x16xf32, #tpu.memory_space<vmem>>, vector<1x16x16xf32>,
    } else {
    }
    return
  }
  func.func @transform_0(%arg0: i32, %arg1: i32) -> (i32, i32, i32) {
    %c0_i32 = arith.constant 0 : i32
    %c0_i32_0 = arith.constant 0 : i32
    %c0_i32_1 = arith.constant 0 : i32
    return %arg0, %c0_i32, %c0_i32_0 : i32, i32, i32
  }
  func.func @transform_1(%arg0: i32, %arg1: i32) -> (i32, i32, i32) {
    %c0_i32 = arith.constant 0 : i32
    %c0_i32_0 = arith.constant 0 : i32
    %c0_i32_1 = arith.constant 0 : i32
    return %arg0, %c0_i32, %c0_i32_0 : i32, i32, i32
  }
  func.func @transform_2(%arg0: i32, %arg1: i32) -> (i32, i32, i32) {
    %c0_i32 = arith.constant 0 : i32
    %c0_i32_0 = arith.constant 0 : i32
    %c0_i32_1 = arith.constant 0 : i32
    return %arg1, %c0_i32, %c0_i32_0 : i32, i32, i32
  }
  func.func @transform_3(%arg0: i32, %arg1: i32) -> (i32, i32, i32) {
    %c0_i32 = arith.constant 0 : i32
    %c0_i32_0 = arith.constant 0 : i32
    %c0_i32_1 = arith.constant 0 : i32
    return %arg1, %c0_i32, %c0_i32_0 : i32, i32, i32
  }
  func.func @transform_4(%arg0: i32, %arg1: i32) -> (i32, i32, i32) {
    %c0_i32 = arith.constant 0 : i32
    %c0_i32_0 = arith.constant 0 : i32
    %c0_i32_1 = arith.constant 0 : i32
    return %arg1, %c0_i32, %c0_i32_0 : i32, i32, i32
  }
  func.func @transform_5(%arg0: i32, %arg1: i32) -> (i32, i32, i32) {
    %c0_i32 = arith.constant 0 : i32
    %c0_i32_0 = arith.constant 0 : i32
    %c0_i32_1 = arith.constant 0 : i32
    return %arg1, %c0_i32, %c0_i32_0 : i32, i32, i32
  }
  func.func @transform_6(%arg0: i32, %arg1: i32) -> (i32, i32, i32) {
    %c0_i32 = arith.constant 0 : i32
    %c0_i32_0 = arith.constant 0 : i32
    %c0_i32_1 = arith.constant 0 : i32
    return %arg1, %c0_i32, %c0_i32_0 : i32, i32, i32
  }
  func.func @transform_7(%arg0: i32, %arg1: i32) -> (i32, i32, i32) {
    %c0_i32 = arith.constant 0 : i32
    %c0_i32_0 = arith.constant 0 : i32
    %c0_i32_1 = arith.constant 0 : i32
    return %arg1, %c0_i32, %c0_i32_0 : i32, i32, i32
  }
  func.func @transform_8(%arg0: i32, %arg1: i32) -> (i32, i32, i32) {
    %c0_i32 = arith.constant 0 : i32
    %c0_i32_0 = arith.constant 0 : i32
    %c0_i32_1 = arith.constant 0 : i32
    return %arg1, %c0_i32, %c0_i32_0 : i32, i32, i32
  }
  func.func @transform_9(%arg0: i32, %arg1: i32) -> (i32, i32, i32) {
    %c0_i32 = arith.constant 0 : i32
    %c0_i32_0 = arith.constant 0 : i32
    %c0_i32_1 = arith.constant 0 : i32
    return %arg1, %c0_i32, %c0_i32_0 : i32, i32, i32
  }
  func.func @transform_10(%arg0: i32, %arg1: i32) -> (i32, i32, i32) {
    %c0_i32 = arith.constant 0 : i32
    %c0_i32_0 = arith.constant 0 : i32
    %c0_i32_1 = arith.constant 0 : i32
    return %arg1, %c0_i32, %c0_i32_0 : i32, i32, i32
  }
  func.func @transform_11(%arg0: i32, %arg1: i32) -> (i32, i32, i32) {
    %c0_i32 = arith.constant 0 : i32
    %c0_i32_0 = arith.constant 0 : i32
    %c0_i32_1 = arith.constant 0 : i32
    return %arg1, %c0_i32, %c0_i32_0 : i32, i32, i32
  }
  func.func @transform_12(%arg0: i32, %arg1: i32) -> (i32, i32, i32) {
    %c0_i32 = arith.constant 0 : i32
    %c0_i32_0 = arith.constant 0 : i32
    %c0_i32_1 = arith.constant 0 : i32
    return %arg1, %c0_i32, %c0_i32_0 : i32, i32, i32
  }
  func.func @transform_13(%arg0: i32, %arg1: i32) -> (i32, i32, i32) {
    %c0_i32 = arith.constant 0 : i32
    %c0_i32_0 = arith.constant 0 : i32
    %c0_i32_1 = arith.constant 0 : i32
    return %arg1, %c0_i32, %c0_i32_0 : i32, i32, i32
  }
  func.func @transform_14(%arg0: i32, %arg1: i32) -> (i32, i32, i32) {
    %c0_i32 = arith.constant 0 : i32
    %c0_i32_0 = arith.constant 0 : i32
    %c0_i32_1 = arith.constant 0 : i32
    return %arg0, %c0_i32, %c0_i32_0 : i32, i32, i32
  }
}

</mosaic_0001>

<llo_original>
// kernel: transformer_forward.1
$region0: #{transformer_forward.1}
  #allocation0 [shape = 'u32[]', space=smem, size = 0x4, offset = 0x4, fixed_abs, tag = 'smem constant byte address 0x4 - core index']
  #allocation1 [shape = 'u32[144,128]{1,0:T(1,128)}', space=vmem, size = 0x12000, scoped, tag = 'internal scratch']
  #allocation2 [shape = 'f32[16,16]{1,0:T(8,128)}', space=vmem, size = 0x2000, scoped, tag = 'scratch operand']
  %s0 = inlined_call_operand.vmem [shape: f32[2,16,16], index: 0, kind: input, shape index: {}]
  %s1 = inlined_call_operand.vmem [shape: f32[2,1,16], index: 1, kind: input, shape index: {}]
  %s2 = inlined_call_operand.vmem [shape: f32[2,1,16], index: 2, kind: input, shape index: {}]
  %s3 = inlined_call_operand.vmem [shape: f32[2,1,16], index: 3, kind: input, shape index: {}]
  %s4 = inlined_call_operand.vmem [shape: f32[2,16,48], index: 4, kind: input, shape index: {}]
  %s5 = inlined_call_operand.vmem [shape: f32[2,1,48], index: 5, kind: input, shape index: {}]
  %s6 = inlined_call_operand.vmem [shape: f32[2,16,16], index: 6, kind: input, shape index: {}]
  %s7 = inlined_call_operand.vmem [shape: f32[2,1,16], index: 7, kind: input, shape index: {}]
  %s8 = inlined_call_operand.vmem [shape: f32[2,1,16], index: 8, kind: input, shape index: {}]
  %s9 = inlined_call_operand.vmem [shape: f32[2,1,16], index: 9, kind: input, shape index: {}]
  %s10 = inlined_call_operand.vmem [shape: f32[2,16,64], index: 10, kind: input, shape index: {}]
  %s11 = inlined_call_operand.vmem [shape: f32[2,1,64], index: 11, kind: input, shape index: {}]
  %s12 = inlined_call_operand.vmem [shape: f32[2,64,16], index: 12, kind: input, shape index: {}]
  %s13 = inlined_call_operand.vmem [shape: f32[2,1,16], index: 13, kind: input, shape index: {}]
  %s14 = inlined_call_operand.vmem [shape: f32[2,16,16], index: 14, kind: output, shape index: {}]
  %s15 = sld [smem:[#allocation0]]
  $region97: #{transformer_forward.1} parent=0
    _
  %s17 = ssub.s32 1, %s15
  %s18 = scalar_select 0, %s17, %s15
  loop: start=0, step=1, limit=6
  $region2: #{transformer_forward.1} parent=0 // loop_pre_header
    _
  $region3: #{transformer_forward.1} parent=0 // loop_header
    %s20 = sphi 0, %s24
    %p21 = scmp.ge.s32.totalorder %s20, 6
    %s27 = sphi 0, %s39
    %s28 = sphi 0, %s35
    %s29 = sphi 0, %s27
    %s30 = sphi 0, %s28
    %s31 = sphi 0, %s29
    %s32 = sphi 0, %s30
    %s42 = sphi 0, %s44
    %s45 = sphi 0, %s42
    %s46 = sphi 0, %s45
    %s62 = sphi 0, %s46
    %s68 = sphi 0, %s70
    %s71 = sphi 0, %s68
    %s72 = sphi 0, %s71
    %s88 = sphi 0, %s72
    %s94 = sphi 0, %s96
    %s97 = sphi 0, %s94
    %s98 = sphi 0, %s97
    %s114 = sphi 0, %s98
    %s120 = sphi 0, %s122
    %s123 = sphi 0, %s120
    %s124 = sphi 0, %s123
    %s140 = sphi 0, %s124
    %s146 = sphi 0, %s148
    %s149 = sphi 0, %s146
    %s150 = sphi 0, %s149
    %s166 = sphi 0, %s150
    %s172 = sphi 0, %s174
    %s175 = sphi 0, %s172
    %s176 = sphi 0, %s175
    %s192 = sphi 0, %s176
    %s198 = sphi 0, %s200
    %s201 = sphi 0, %s198
    %s202 = sphi 0, %s201
    %s218 = sphi 0, %s202
    %s224 = sphi 0, %s226
    %s227 = sphi 0, %s224
    %s228 = sphi 0, %s227
    %s244 = sphi 0, %s228
    %s250 = sphi 0, %s252
    %s253 = sphi 0, %s250
    %s254 = sphi 0, %s253
    %s270 = sphi 0, %s254
    %s276 = sphi 0, %s278
    %s279 = sphi 0, %s276
    %s280 = sphi 0, %s279
    %s296 = sphi 0, %s280
    %s302 = sphi 0, %s304
    %s305 = sphi 0, %s302
    %s306 = sphi 0, %s305
    %s322 = sphi 0, %s306
    %s328 = sphi 0, %s330
    %s331 = sphi 0, %s328
    %s332 = sphi 0, %s331
    %s348 = sphi 0, %s332
    %s354 = sphi 0, %s356
    %s357 = sphi 0, %s354
    %s358 = sphi 0, %s357
    %s374 = sphi 0, %s358
    %s380 = sphi 0, %s382
    %s383 = sphi 0, %s380
    %s384 = sphi 0, %s383
    %s400 = sphi 0, %s384
    %s406 = sphi 0, %s408
    %s409 = sphi 0, %s406
    %s410 = sphi 0, %s409
    %s426 = sphi 0, %s410
  $region4: #{transformer_forward.1} parent=0 // loop_header_branch
    %23 = sbr.rel (%p21) target = $region8
  $region5: #{transformer_forward.1} parent=0 // loop_body
    %s25 = ssub.s32 %s20, 1
    %s26 = ssub.s32 %s20, 2
    %s33 = sadd.s32 1, %s28
    %p34 = scmp.ge.s32.totalorder %s33, 2
    %s35 = scalar_select %p34, 0, %s33
    %s36 = sadd.s32 1, %s27
    %s37 = scalar_select %p34, %s36, %s27
    %p38 = scmp.ge.s32.totalorder %s37, 2
    %s39 = scalar_select %p38, 0, %s37
    %s40 = ssub.s32 %s27, %s39
    %p41 = scmp.eq.s32.totalorder %s40, 0
    %s43 = sadd.s32 %s42, 1
    %s44 = scalar_select %p41, %s42, %s43
    %p47 = pneg %p41
    %p48 = scmp.eq.s32.totalorder %s20, 3
    %p49 = por %p47, %p48
    %p50 = scmp.ne.s32.totalorder %s42, %s45
    %p51 = scmp.eq.s32.totalorder %s20, 0
    %p52 = por %p50, %p51
    %p53 = scmp.ne.s32.totalorder %s42, %s45
    %p54 = scmp.eq.s32.totalorder %s25, 3
    %p55 = por %p53, %p54
    %p56 = scmp.ne.s32.totalorder %s45, %s46
    %p57 = scmp.eq.s32.totalorder %s25, 0
    %p58 = por %p56, %p57
    %p59 = scmp.ne.s32.totalorder %s45, %s46
    %p60 = scmp.eq.s32.totalorder %s26, 3
    %p61 = por %p59, %p60
    %p63 = scmp.ne.s32.totalorder %s46, %s62
    %p64 = scmp.eq.s32.totalorder %s26, 0
    %p65 = por %p63, %p64
    %s66 = ssub.s32 %s27, %s39
    %p67 = scmp.eq.s32.totalorder %s66, 0
    %s69 = sadd.s32 %s68, 1
    %s70 = scalar_select %p67, %s68, %s69
    %p73 = pneg %p67
    %p74 = scmp.eq.s32.totalorder %s20, 3
    %p75 = por %p73, %p74
    %p76 = scmp.ne.s32.totalorder %s68, %s71
    %p77 = scmp.eq.s32.totalorder %s20, 0
    %p78 = por %p76, %p77
    %p79 = scmp.ne.s32.totalorder %s68, %s71
    %p80 = scmp.eq.s32.totalorder %s25, 3
    %p81 = por %p79, %p80
    %p82 = scmp.ne.s32.totalorder %s71, %s72
    %p83 = scmp.eq.s32.totalorder %s25, 0
    %p84 = por %p82, %p83
    %p85 = scmp.ne.s32.totalorder %s71, %s72
    %p86 = scmp.eq.s32.totalorder %s26, 3
    %p87 = por %p85, %p86
    %p89 = scmp.ne.s32.totalorder %s72, %s88
    %p90 = scmp.eq.s32.totalorder %s26, 0
    %p91 = por %p89, %p90
    %s92 = ssub.s32 %s28, %s35
    %p93 = scmp.eq.s32.totalorder %s92, 0
    %s95 = sadd.s32 %s94, 1
    %s96 = scalar_select %p93, %s94, %s95
    %p99 = pneg %p93
    %p100 = scmp.eq.s32.totalorder %s20, 3
    %p101 = por %p99, %p100
    %p102 = scmp.ne.s32.totalorder %s94, %s97
    %p103 = scmp.eq.s32.totalorder %s20, 0
    %p104 = por %p102, %p103
    %p105 = scmp.ne.s32.totalorder %s94, %s97
    %p106 = scmp.eq.s32.totalorder %s25, 3
    %p107 = por %p105, %p106
    %p108 = scmp.ne.s32.totalorder %s97, %s98
    %p109 = scmp.eq.s32.totalorder %s25, 0
    %p110 = por %p108, %p109
    %p111 = scmp.ne.s32.totalorder %s97, %s98
    %p112 = scmp.eq.s32.totalorder %s26, 3
    %p113 = por %p111, %p112
    %p115 = scmp.ne.s32.totalorder %s98, %s114
    %p116 = scmp.eq.s32.totalorder %s26, 0
    %p117 = por %p115, %p116
    %s118 = ssub.s32 %s28, %s35
    %p119 = scmp.eq.s32.totalorder %s118, 0
    %s121 = sadd.s32 %s120, 1
    %s122 = scalar_select %p119, %s120, %s121
    %p125 = pneg %p119
    %p126 = scmp.eq.s32.totalorder %s20, 3
    %p127 = por %p125, %p126
    %p128 = scmp.ne.s32.totalorder %s120, %s123
    %p129 = scmp.eq.s32.totalorder %s20, 0
    %p130 = por %p128, %p129
    %p131 = scmp.ne.s32.totalorder %s120, %s123
    %p132 = scmp.eq.s32.totalorder %s25, 3
    %p133 = por %p131, %p132
    %p134 = scmp.ne.s32.totalorder %s123, %s124
    %p135 = scmp.eq.s32.totalorder %s25, 0
    %p136 = por %p134, %p135
    %p137 = scmp.ne.s32.totalorder %s123, %s124
    %p138 = scmp.eq.s32.totalorder %s26, 3
    %p139 = por %p137, %p138
    %p141 = scmp.ne.s32.totalorder %s124, %s140
    %p142 = scmp.eq.s32.totalorder %s26, 0
    %p143 = por %p141, %p142
    %s144 = ssub.s32 %s28, %s35
    %p145 = scmp.eq.s32.totalorder %s144, 0
    %s147 = sadd.s32 %s146, 1
    %s148 = scalar_select %p145, %s146, %s147
    %p151 = pneg %p145
    %p152 = scmp.eq.s32.totalorder %s20, 3
    %p153 = por %p151, %p152
    %p154 = scmp.ne.s32.totalorder %s146, %s149
    %p155 = scmp.eq.s32.totalorder %s20, 0
    %p156 = por %p154, %p155
    %p157 = scmp.ne.s32.totalorder %s146, %s149
    %p158 = scmp.eq.s32.totalorder %s25, 3
    %p159 = por %p157, %p158
    %p160 = scmp.ne.s32.totalorder %s149, %s150
    %p161 = scmp.eq.s32.totalorder %s25, 0
    %p162 = por %p160, %p161
    %p163 = scmp.ne.s32.totalorder %s149, %s150
    %p164 = scmp.eq.s32.totalorder %s26, 3
    %p165 = por %p163, %p164
    %p167 = scmp.ne.s32.totalorder %s150, %s166
    %p168 = scmp.eq.s32.totalorder %s26, 0
    %p169 = por %p167, %p168
    %s170 = ssub.s32 %s28, %s35
    %p171 = scmp.eq.s32.totalorder %s170, 0
    %s173 = sadd.s32 %s172, 1
    %s174 = scalar_select %p171, %s172, %s173
    %p177 = pneg %p171
    %p178 = scmp.eq.s32.totalorder %s20, 3
    %p179 = por %p177, %p178
    %p180 = scmp.ne.s32.totalorder %s172, %s175
    %p181 = scmp.eq.s32.totalorder %s20, 0
    %p182 = por %p180, %p181
    %p183 = scmp.ne.s32.totalorder %s172, %s175
    %p184 = scmp.eq.s32.totalorder %s25, 3
    %p185 = por %p183, %p184
    %p186 = scmp.ne.s32.totalorder %s175, %s176
    %p187 = scmp.eq.s32.totalorder %s25, 0
    %p188 = por %p186, %p187
    %p189 = scmp.ne.s32.totalorder %s175, %s176
    %p190 = scmp.eq.s32.totalorder %s26, 3
    %p191 = por %p189, %p190
    %p193 = scmp.ne.s32.totalorder %s176, %s192
    %p194 = scmp.eq.s32.totalorder %s26, 0
    %p195 = por %p193, %p194
    %s196 = ssub.s32 %s28, %s35
    %p197 = scmp.eq.s32.totalorder %s196, 0
    %s199 = sadd.s32 %s198, 1
    %s200 = scalar_select %p197, %s198, %s199
    %p203 = pneg %p197
    %p204 = scmp.eq.s32.totalorder %s20, 3
    %p205 = por %p203, %p204
    %p206 = scmp.ne.s32.totalorder %s198, %s201
    %p207 = scmp.eq.s32.totalorder %s20, 0
    %p208 = por %p206, %p207
    %p209 = scmp.ne.s32.totalorder %s198, %s201
    %p210 = scmp.eq.s32.totalorder %s25, 3
    %p211 = por %p209, %p210
    %p212 = scmp.ne.s32.totalorder %s201, %s202
    %p213 = scmp.eq.s32.totalorder %s25, 0
    %p214 = por %p212, %p213
    %p215 = scmp.ne.s32.totalorder %s201, %s202
    %p216 = scmp.eq.s32.totalorder %s26, 3
    %p217 = por %p215, %p216
    %p219 = scmp.ne.s32.totalorder %s202, %s218
    %p220 = scmp.eq.s32.totalorder %s26, 0
    %p221 = por %p219, %p220
    %s222 = ssub.s32 %s28, %s35
    %p223 = scmp.eq.s32.totalorder %s222, 0
    %s225 = sadd.s32 %s224, 1
    %s226 = scalar_select %p223, %s224, %s225
    %p229 = pneg %p223
    %p230 = scmp.eq.s32.totalorder %s20, 3
    %p231 = por %p229, %p230
    %p232 = scmp.ne.s32.totalorder %s224, %s227
    %p233 = scmp.eq.s32.totalorder %s20, 0
    %p234 = por %p232, %p233
    %p235 = scmp.ne.s32.totalorder %s224, %s227
    %p236 = scmp.eq.s32.totalorder %s25, 3
    %p237 = por %p235, %p236
    %p238 = scmp.ne.s32.totalorder %s227, %s228
    %p239 = scmp.eq.s32.totalorder %s25, 0
    %p240 = por %p238, %p239
    %p241 = scmp.ne.s32.totalorder %s227, %s228
    %p242 = scmp.eq.s32.totalorder %s26, 3
    %p243 = por %p241, %p242
    %p245 = scmp.ne.s32.totalorder %s228, %s244
    %p246 = scmp.eq.s32.totalorder %s26, 0
    %p247 = por %p245, %p246
    %s248 = ssub.s32 %s28, %s35
    %p249 = scmp.eq.s32.totalorder %s248, 0
    %s251 = sadd.s32 %s250, 1
    %s252 = scalar_select %p249, %s250, %s251
    %p255 = pneg %p249
    %p256 = scmp.eq.s32.totalorder %s20, 3
    %p257 = por %p255, %p256
    %p258 = scmp.ne.s32.totalorder %s250, %s253
    %p259 = scmp.eq.s32.totalorder %s20, 0
    %p260 = por %p258, %p259
    %p261 = scmp.ne.s32.totalorder %s250, %s253
    %p262 = scmp.eq.s32.totalorder %s25, 3
    %p263 = por %p261, %p262
    %p264 = scmp.ne.s32.totalorder %s253, %s254
    %p265 = scmp.eq.s32.totalorder %s25, 0
    %p266 = por %p264, %p265
    %p267 = scmp.ne.s32.totalorder %s253, %s254
    %p268 = scmp.eq.s32.totalorder %s26, 3
    %p269 = por %p267, %p268
    %p271 = scmp.ne.s32.totalorder %s254, %s270
    %p272 = scmp.eq.s32.totalorder %s26, 0
    %p273 = por %p271, %p272
    %s274 = ssub.s32 %s28, %s35
    %p275 = scmp.eq.s32.totalorder %s274, 0
    %s277 = sadd.s32 %s276, 1
    %s278 = scalar_select %p275, %s276, %s277
    %p281 = pneg %p275
    %p282 = scmp.eq.s32.totalorder %s20, 3
    %p283 = por %p281, %p282
    %p284 = scmp.ne.s32.totalorder %s276, %s279
    %p285 = scmp.eq.s32.totalorder %s20, 0
    %p286 = por %p284, %p285
    %p287 = scmp.ne.s32.totalorder %s276, %s279
    %p288 = scmp.eq.s32.totalorder %s25, 3
    %p289 = por %p287, %p288
    %p290 = scmp.ne.s32.totalorder %s279, %s280
    %p291 = scmp.eq.s32.totalorder %s25, 0
    %p292 = por %p290, %p291
    %p293 = scmp.ne.s32.totalorder %s279, %s280
    %p294 = scmp.eq.s32.totalorder %s26, 3
    %p295 = por %p293, %p294
    %p297 = scmp.ne.s32.totalorder %s280, %s296
    %p298 = scmp.eq.s32.totalorder %s26, 0
    %p299 = por %p297, %p298
    %s300 = ssub.s32 %s28, %s35
    %p301 = scmp.eq.s32.totalorder %s300, 0
    %s303 = sadd.s32 %s302, 1
    %s304 = scalar_select %p301, %s302, %s303
    %p307 = pneg %p301
    %p308 = scmp.eq.s32.totalorder %s20, 3
    %p309 = por %p307, %p308
    %p310 = scmp.ne.s32.totalorder %s302, %s305
    %p311 = scmp.eq.s32.totalorder %s20, 0
    %p312 = por %p310, %p311
    %p313 = scmp.ne.s32.totalorder %s302, %s305
    %p314 = scmp.eq.s32.totalorder %s25, 3
    %p315 = por %p313, %p314
    %p316 = scmp.ne.s32.totalorder %s305, %s306
    %p317 = scmp.eq.s32.totalorder %s25, 0
    %p318 = por %p316, %p317
    %p319 = scmp.ne.s32.totalorder %s305, %s306
    %p320 = scmp.eq.s32.totalorder %s26, 3
    %p321 = por %p319, %p320
    %p323 = scmp.ne.s32.totalorder %s306, %s322
    %p324 = scmp.eq.s32.totalorder %s26, 0
    %p325 = por %p323, %p324
    %s326 = ssub.s32 %s28, %s35
    %p327 = scmp.eq.s32.totalorder %s326, 0
    %s329 = sadd.s32 %s328, 1
    %s330 = scalar_select %p327, %s328, %s329
    %p333 = pneg %p327
    %p334 = scmp.eq.s32.totalorder %s20, 3
    %p335 = por %p333, %p334
    %p336 = scmp.ne.s32.totalorder %s328, %s331
    %p337 = scmp.eq.s32.totalorder %s20, 0
    %p338 = por %p336, %p337
    %p339 = scmp.ne.s32.totalorder %s328, %s331
    %p340 = scmp.eq.s32.totalorder %s25, 3
    %p341 = por %p339, %p340
    %p342 = scmp.ne.s32.totalorder %s331, %s332
    %p343 = scmp.eq.s32.totalorder %s25, 0
    %p344 = por %p342, %p343
    %p345 = scmp.ne.s32.totalorder %s331, %s332
    %p346 = scmp.eq.s32.totalorder %s26, 3
    %p347 = por %p345, %p346
    %p349 = scmp.ne.s32.totalorder %s332, %s348
    %p350 = scmp.eq.s32.totalorder %s26, 0
    %p351 = por %p349, %p350
    %s352 = ssub.s32 %s28, %s35
    %p353 = scmp.eq.s32.totalorder %s352, 0
    %s355 = sadd.s32 %s354, 1
    %s356 = scalar_select %p353, %s354, %s355
    %p359 = pneg %p353
    %p360 = scmp.eq.s32.totalorder %s20, 3
    %p361 = por %p359, %p360
    %p362 = scmp.ne.s32.totalorder %s354, %s357
    %p363 = scmp.eq.s32.totalorder %s20, 0
    %p364 = por %p362, %p363
    %p365 = scmp.ne.s32.totalorder %s354, %s357
    %p366 = scmp.eq.s32.totalorder %s25, 3
    %p367 = por %p365, %p366
    %p368 = scmp.ne.s32.totalorder %s357, %s358
    %p369 = scmp.eq.s32.totalorder %s25, 0
    %p370 = por %p368, %p369
    %p371 = scmp.ne.s32.totalorder %s357, %s358
    %p372 = scmp.eq.s32.totalorder %s26, 3
    %p373 = por %p371, %p372
    %p375 = scmp.ne.s32.totalorder %s358, %s374
    %p376 = scmp.eq.s32.totalorder %s26, 0
    %p377 = por %p375, %p376
    %s378 = ssub.s32 %s28, %s35
    %p379 = scmp.eq.s32.totalorder %s378, 0
    %s381 = sadd.s32 %s380, 1
    %s382 = scalar_select %p379, %s380, %s381
    %p385 = pneg %p379
    %p386 = scmp.eq.s32.totalorder %s20, 3
    %p387 = por %p385, %p386
    %p388 = scmp.ne.s32.totalorder %s380, %s383
    %p389 = scmp.eq.s32.totalorder %s20, 0
    %p390 = por %p388, %p389
    %p391 = scmp.ne.s32.totalorder %s380, %s383
    %p392 = scmp.eq.s32.totalorder %s25, 3
    %p393 = por %p391, %p392
    %p394 = scmp.ne.s32.totalorder %s383, %s384
    %p395 = scmp.eq.s32.totalorder %s25, 0
    %p396 = por %p394, %p395
    %p397 = scmp.ne.s32.totalorder %s383, %s384
    %p398 = scmp.eq.s32.totalorder %s26, 3
    %p399 = por %p397, %p398
    %p401 = scmp.ne.s32.totalorder %s384, %s400
    %p402 = scmp.eq.s32.totalorder %s26, 0
    %p403 = por %p401, %p402
    %s404 = ssub.s32 %s27, %s39
    %p405 = scmp.eq.s32.totalorder %s404, 0
    %s407 = sadd.s32 %s406, 1
    %s408 = scalar_select %p405, %s406, %s407
    %p411 = pneg %p405
    %p412 = scmp.eq.s32.totalorder %s20, 3
    %p413 = por %p411, %p412
    %p414 = scmp.ne.s32.totalorder %s406, %s409
    %p415 = scmp.eq.s32.totalorder %s20, 0
    %p416 = por %p414, %p415
    %p417 = scmp.ne.s32.totalorder %s406, %s409
    %p418 = scmp.eq.s32.totalorder %s25, 3
    %p419 = por %p417, %p418
    %p420 = scmp.ne.s32.totalorder %s409, %s410
    %p421 = scmp.eq.s32.totalorder %s25, 0
    %p422 = por %p420, %p421
    %p423 = scmp.ne.s32.totalorder %s409, %s410
    %p424 = scmp.eq.s32.totalorder %s26, 3
    %p425 = por %p423, %p424
    %p427 = scmp.ne.s32.totalorder %s410, %s426
    %p428 = scmp.eq.s32.totalorder %s26, 0
    %p429 = por %p427, %p428
    %p430 = scmp.le.s32.totalorder 1, %s20
    %p431 = scmp.lt.s32.totalorder %s20, 5
    %p432 = pnand %p430, %p431
    %p433 = pneg %p432
    // Predicated region
    $region9: #{transformer_forward.1} parent=5 // pred_check
      _
    $region10: #{transformer_forward.1} parent=5 // pred_check_branch
      %435 = sbr.rel (%p432) target = $region12
    $region11: #{transformer_forward.1} parent=5 // pred_region
      %s436 = ssub.s32 %s20, 1
    $region12: #{transformer_forward.1} parent=5 // pred_fallthru
      _
    %p437 = scmp.lt.s32.totalorder %s20, 4
    // Predicated region
    $region13: #{transformer_forward.1} parent=5 // pred_check
      %p438 = pneg %p437
    $region14: #{transformer_forward.1} parent=5 // pred_check_branch
      %440 = sbr.rel (%p438) target = $region16
    $region15: #{transformer_forward.1} parent=5 // pred_region
      // Predicated region
      $region17: #{transformer_forward.1} parent=15 // pred_check
        %p441 = pneg %p52
      $region18: #{transformer_forward.1} parent=15 // pred_check_branch
        %443 = sbr.rel (%p441) target = $region20
      $region19: #{transformer_forward.1} parent=15 // pred_region
        %p444 = scmp.lt.s32.totalorder %s27, 1
        %s445 = scalar_select %p444, %s27, 1
        %s446 = smul.addr %s445, 2
        %s447 = smul.addr %s446, 8
        %s448 = scalar_lea.vmem %s0, %s447
      $region20: #{transformer_forward.1} parent=15 // pred_fallthru
        _
      // Predicated region
      $region21: #{transformer_forward.1} parent=15 // pred_check
        %p449 = pneg %p78
      $region22: #{transformer_forward.1} parent=15 // pred_check_branch
        %451 = sbr.rel (%p449) target = $region24
      $region23: #{transformer_forward.1} parent=15 // pred_region
        %p452 = scmp.lt.s32.totalorder %s27, 1
        %s453 = scalar_select %p452, %s27, 1
        %s454 = scalar_lea.vmem %s1, %s453
      $region24: #{transformer_forward.1} parent=15 // pred_fallthru
        _
      // Predicated region
      $region25: #{transformer_forward.1} parent=15 // pred_check
        %p455 = pneg %p104
      $region26: #{transformer_forward.1} parent=15 // pred_check_branch
        %457 = sbr.rel (%p455) target = $region28
      $region27: #{transformer_forward.1} parent=15 // pred_region
        %p458 = scmp.lt.s32.totalorder %s28, 1
        %s459 = scalar_select %p458, %s28, 1
        %s460 = scalar_lea.vmem %s2, %s459
      $region28: #{transformer_forward.1} parent=15 // pred_fallthru
        _
      // Predicated region
      $region29: #{transformer_forward.1} parent=15 // pred_check
        %p461 = pneg %p130
      $region30: #{transformer_forward.1} parent=15 // pred_check_branch
        %463 = sbr.rel (%p461) target = $region32
      $region31: #{transformer_forward.1} parent=15 // pred_region
        %p464 = scmp.lt.s32.totalorder %s28, 1
        %s465 = scalar_select %p464, %s28, 1
        %s466 = scalar_lea.vmem %s3, %s465
      $region32: #{transformer_forward.1} parent=15 // pred_fallthru
        _
      // Predicated region
      $region33: #{transformer_forward.1} parent=15 // pred_check
        %p467 = pneg %p156
      $region34: #{transformer_forward.1} parent=15 // pred_check_branch
        %469 = sbr.rel (%p467) target = $region36
      $region35: #{transformer_forward.1} parent=15 // pred_region
        %p470 = scmp.lt.s32.totalorder %s28, 1
        %s471 = scalar_select %p470, %s28, 1
        %s472 = smul.addr %s471, 2
        %s473 = smul.addr %s472, 8
        %s474 = scalar_lea.vmem %s4, %s473
      $region36: #{transformer_forward.1} parent=15 // pred_fallthru
        _
      // Predicated region
      $region37: #{transformer_forward.1} parent=15 // pred_check
        %p475 = pneg %p182
      $region38: #{transformer_forward.1} parent=15 // pred_check_branch
        %477 = sbr.rel (%p475) target = $region40
      $region39: #{transformer_forward.1} parent=15 // pred_region
        %p478 = scmp.lt.s32.totalorder %s28, 1
        %s479 = scalar_select %p478, %s28, 1
        %s480 = scalar_lea.vmem %s5, %s479
      $region40: #{transformer_forward.1} parent=15 // pred_fallthru
        _
      // Predicated region
      $region41: #{transformer_forward.1} parent=15 // pred_check
        %p481 = pneg %p208
      $region42: #{transformer_forward.1} parent=15 // pred_check_branch
        %483 = sbr.rel (%p481) target = $region44
      $region43: #{transformer_forward.1} parent=15 // pred_region
        %p484 = scmp.lt.s32.totalorder %s28, 1
        %s485 = scalar_select %p484, %s28, 1
        %s486 = smul.addr %s485, 2
        %s487 = smul.addr %s486, 8
        %s488 = scalar_lea.vmem %s6, %s487
      $region44: #{transformer_forward.1} parent=15 // pred_fallthru
        _
      // Predicated region
      $region45: #{transformer_forward.1} parent=15 // pred_check
        %p489 = pneg %p234
      $region46: #{transformer_forward.1} parent=15 // pred_check_branch
        %491 = sbr.rel (%p489) target = $region48
      $region47: #{transformer_forward.1} parent=15 // pred_region
        %p492 = scmp.lt.s32.totalorder %s28, 1
        %s493 = scalar_select %p492, %s28, 1
        %s494 = scalar_lea.vmem %s7, %s493
      $region48: #{transformer_forward.1} parent=15 // pred_fallthru
        _
      // Predicated region
      $region49: #{transformer_forward.1} parent=15 // pred_check
        %p495 = pneg %p260
      $region50: #{transformer_forward.1} parent=15 // pred_check_branch
        %497 = sbr.rel (%p495) target = $region52
      $region51: #{transformer_forward.1} parent=15 // pred_region
        %p498 = scmp.lt.s32.totalorder %s28, 1
        %s499 = scalar_select %p498, %s28, 1
        %s500 = scalar_lea.vmem %s8, %s499
      $region52: #{transformer_forward.1} parent=15 // pred_fallthru
        _
      // Predicated region
      $region53: #{transformer_forward.1} parent=15 // pred_check
        %p501 = pneg %p286
      $region54: #{transformer_forward.1} parent=15 // pred_check_branch
        %503 = sbr.rel (%p501) target = $region56
      $region55: #{transformer_forward.1} parent=15 // pred_region
        %p504 = scmp.lt.s32.totalorder %s28, 1
        %s505 = scalar_select %p504, %s28, 1
        %s506 = scalar_lea.vmem %s9, %s505
      $region56: #{transformer_forward.1} parent=15 // pred_fallthru
        _
      // Predicated region
      $region57: #{transformer_forward.1} parent=15 // pred_check
        %p507 = pneg %p312
      $region58: #{transformer_forward.1} parent=15 // pred_check_branch
        %509 = sbr.rel (%p507) target = $region60
      $region59: #{transformer_forward.1} parent=15 // pred_region
        %p510 = scmp.lt.s32.totalorder %s28, 1
        %s511 = scalar_select %p510, %s28, 1
        %s512 = smul.addr %s511, 2
        %s513 = smul.addr %s512, 8
        %s514 = scalar_lea.vmem %s10, %s513
      $region60: #{transformer_forward.1} parent=15 // pred_fallthru
        _
      // Predicated region
      $region61: #{transformer_forward.1} parent=15 // pred_check
        %p515 = pneg %p338
      $region62: #{transformer_forward.1} parent=15 // pred_check_branch
        %517 = sbr.rel (%p515) target = $region64
      $region63: #{transformer_forward.1} parent=15 // pred_region
        %p518 = scmp.lt.s32.totalorder %s28, 1
        %s519 = scalar_select %p518, %s28, 1
        %s520 = scalar_lea.vmem %s11, %s519
      $region64: #{transformer_forward.1} parent=15 // pred_fallthru
        _
      // Predicated region
      $region65: #{transformer_forward.1} parent=15 // pred_check
        %p521 = pneg %p364
      $region66: #{transformer_forward.1} parent=15 // pred_check_branch
        %523 = sbr.rel (%p521) target = $region68
      $region67: #{transformer_forward.1} parent=15 // pred_region
        %p524 = scmp.lt.s32.totalorder %s28, 1
        %s525 = scalar_select %p524, %s28, 1
        %s526 = smul.addr %s525, 8
        %s527 = smul.addr %s526, 8
        %s528 = scalar_lea.vmem %s12, %s527
      $region68: #{transformer_forward.1} parent=15 // pred_fallthru
        _
      // Predicated region
      $region69: #{transformer_forward.1} parent=15 // pred_check
        %p529 = pneg %p390
      $region70: #{transformer_forward.1} parent=15 // pred_check_branch
        %531 = sbr.rel (%p529) target = $region72
      $region71: #{transformer_forward.1} parent=15 // pred_region
        %p532 = scmp.lt.s32.totalorder %s28, 1
        %s533 = scalar_select %p532, %s28, 1
        %s534 = scalar_lea.vmem %s13, %s533
      $region72: #{transformer_forward.1} parent=15 // pred_fallthru
        _
    $region16: #{transformer_forward.1} parent=5 // pred_fallthru
      _
    %p535 = scmp.le.s32.totalorder 1, %s20
    %p536 = scmp.lt.s32.totalorder %s20, 5
    %p537 = pnand %p535, %p536
    %p538 = pneg %p537
    // Predicated region
    $region73: #{transformer_forward.1} parent=5 // pred_check
      _
    $region74: #{transformer_forward.1} parent=5 // pred_check_branch
      %540 = sbr.rel (%p537) target = $region76
    $region75: #{transformer_forward.1} parent=5 // pred_region
      %s541 = ssub.s32 %s20, 1
      %p542 = scmp.lt.s32.totalorder %s29, 1
      %s543 = scalar_select %p542, %s29, 1
      %s544 = smul.addr %s543, 2
      %s545 = smul.addr %s544, 8
      %s546 = scalar_lea.vmem %s0, %s545
      %p547 = pneg %p58
      %p548 = pneg %p55
      %p549 = scmp.lt.s32.totalorder %s29, 1
      %s550 = scalar_select %p549, %s29, 1
      %s551 = scalar_lea.vmem %s1, %s550
      %p552 = pneg %p84
      %p553 = pneg %p81
      %p554 = scmp.lt.s32.totalorder %s30, 1
      %s555 = scalar_select %p554, %s30, 1
      %s556 = scalar_lea.vmem %s2, %s555
      %p557 = pneg %p110
      %p558 = pneg %p107
      %p559 = scmp.lt.s32.totalorder %s30, 1
      %s560 = scalar_select %p559, %s30, 1
      %s561 = scalar_lea.vmem %s3, %s560
      %p562 = pneg %p136
      %p563 = pneg %p133
      %p564 = scmp.lt.s32.totalorder %s30, 1
      %s565 = scalar_select %p564, %s30, 1
      %s566 = smul.addr %s565, 2
      %s567 = smul.addr %s566, 8
      %s568 = scalar_lea.vmem %s4, %s567
      %p569 = pneg %p162
      %p570 = pneg %p159
      %p571 = scmp.lt.s32.totalorder %s30, 1
      %s572 = scalar_select %p571, %s30, 1
      %s573 = scalar_lea.vmem %s5, %s572
      %p574 = pneg %p188
      %p575 = pneg %p185
      %p576 = scmp.lt.s32.totalorder %s30, 1
      %s577 = scalar_select %p576, %s30, 1
      %s578 = smul.addr %s577, 2
      %s579 = smul.addr %s578, 8
      %s580 = scalar_lea.vmem %s6, %s579
      %p581 = pneg %p214
      %p582 = pneg %p211
      %p583 = scmp.lt.s32.totalorder %s30, 1
      %s584 = scalar_select %p583, %s30, 1
      %s585 = scalar_lea.vmem %s7, %s584
      %p586 = pneg %p240
      %p587 = pneg %p237
      %p588 = scmp.lt.s32.totalorder %s30, 1
      %s589 = scalar_select %p588, %s30, 1
      %s590 = scalar_lea.vmem %s8, %s589
      %p591 = pneg %p266
      %p592 = pneg %p263
      %p593 = scmp.lt.s32.totalorder %s30, 1
      %s594 = scalar_select %p593, %s30, 1
      %s595 = scalar_lea.vmem %s9, %s594
      %p596 = pneg %p292
      %p597 = pneg %p289
      %p598 = scmp.lt.s32.totalorder %s30, 1
      %s599 = scalar_select %p598, %s30, 1
      %s600 = smul.addr %s599, 2
      %s601 = smul.addr %s600, 8
      %s602 = scalar_lea.vmem %s10, %s601
      %p603 = pneg %p318
      %p604 = pneg %p315
      %p605 = scmp.lt.s32.totalorder %s30, 1
      %s606 = scalar_select %p605, %s30, 1
      %s607 = scalar_lea.vmem %s11, %s606
      %p608 = pneg %p344
      %p609 = pneg %p341
      %p610 = scmp.lt.s32.totalorder %s30, 1
      %s611 = scalar_select %p610, %s30, 1
      %s612 = smul.addr %s611, 8
      %s613 = smul.addr %s612, 8
      %s614 = scalar_lea.vmem %s12, %s613
      %p615 = pneg %p370
      %p616 = pneg %p367
      %p617 = scmp.lt.s32.totalorder %s30, 1
      %s618 = scalar_select %p617, %s30, 1
      %s619 = scalar_lea.vmem %s13, %s618
      %p620 = pneg %p396
      %p621 = pneg %p393
      %p622 = pneg %p422
      %p623 = pneg %p419
      %p624 = scmp.lt.s32.totalorder %s29, 1
      %s625 = scalar_select %p624, %s29, 1
      %s626 = smul.addr %s625, 2
      %s627 = smul.addr %s626, 8
      %s628 = scalar_lea.vmem %s14, %s627
      %p629 = scmp.lt.s32.totalorder %s29, 1
      %s630 = scalar_select %p629, %s29, 1
      %s631 = smul.addr %s630, 2
      %s632 = smul.addr %s631, 8
      %s633 = scalar_lea.vmem %s0, %s632
      %p634 = scmp.lt.s32.totalorder %s29, 1
      %s635 = scalar_select %p634, %s29, 1
      %s636 = scalar_lea.vmem %s1, %s635
      %p637 = scmp.lt.s32.totalorder %s30, 1
      %s638 = scalar_select %p637, %s30, 1
      %s639 = scalar_lea.vmem %s2, %s638
      %p640 = scmp.lt.s32.totalorder %s30, 1
      %s641 = scalar_select %p640, %s30, 1
      %s642 = scalar_lea.vmem %s3, %s641
      %p643 = scmp.lt.s32.totalorder %s30, 1
      %s644 = scalar_select %p643, %s30, 1
      %s645 = smul.addr %s644, 2
      %s646 = smul.addr %s645, 8
      %s647 = scalar_lea.vmem %s4, %s646
      %p648 = scmp.lt.s32.totalorder %s30, 1
      %s649 = scalar_select %p648, %s30, 1
      %s650 = scalar_lea.vmem %s5, %s649
      %p651 = scmp.lt.s32.totalorder %s30, 1
      %s652 = scalar_select %p651, %s30, 1
      %s653 = smul.addr %s652, 2
      %s654 = smul.addr %s653, 8
      %s655 = scalar_lea.vmem %s6, %s654
      %p656 = scmp.lt.s32.totalorder %s30, 1
      %s657 = scalar_select %p656, %s30, 1
      %s658 = scalar_lea.vmem %s7, %s657
      %p659 = scmp.lt.s32.totalorder %s30, 1
      %s660 = scalar_select %p659, %s30, 1
      %s661 = scalar_lea.vmem %s8, %s660
      %p662 = scmp.lt.s32.totalorder %s30, 1
      %s663 = scalar_select %p662, %s30, 1
      %s664 = scalar_lea.vmem %s9, %s663
      %p665 = scmp.lt.s32.totalorder %s30, 1
      %s666 = scalar_select %p665, %s30, 1
      %s667 = smul.addr %s666, 2
      %s668 = smul.addr %s667, 8
      %s669 = scalar_lea.vmem %s10, %s668
      %p670 = scmp.lt.s32.totalorder %s30, 1
      %s671 = scalar_select %p670, %s30, 1
      %s672 = scalar_lea.vmem %s11, %s671
      %p673 = scmp.lt.s32.totalorder %s30, 1
      %s674 = scalar_select %p673, %s30, 1
      %s675 = smul.addr %s674, 8
      %s676 = smul.addr %s675, 8
      %s677 = scalar_lea.vmem %s12, %s676
      %p678 = scmp.lt.s32.totalorder %s30, 1
      %s679 = scalar_select %p678, %s30, 1
      %s680 = scalar_lea.vmem %s13, %s679
      %p681 = scmp.lt.s32.totalorder %s29, 1
      %s682 = scalar_select %p681, %s29, 1
      %s683 = smul.addr %s682, 2
      %s684 = smul.addr %s683, 8
      %s685 = scalar_lea.vmem %s14, %s684
      %p686 = scmp.eq.s32.totalorder %s30, 0
      // Predicated region
      $region77: #{transformer_forward.1} parent=75 // pred_check
        %p687 = pneg %p686
      $region78: #{transformer_forward.1} parent=75 // pred_check_branch
        %689 = sbr.rel (%p687) target = $region80
      $region79: #{transformer_forward.1} parent=75 // pred_region
        %v690 = vld [vmem:[%s633] sm:$0xff]
        %v691 = vld [vmem:[%s633 + $0x8] sm:$0xff]
        %vm692 = vcmask 130048
        %693 = vst.msk [vmem:[#allocation2] sm:$0xff] %vm692, %v690
        %694 = vst.msk [vmem:[#allocation2 + $0x8] sm:$0xff] %vm692, %v691
      $region80: #{transformer_forward.1} parent=75 // pred_fallthru
        _
      %v695 = vld [vmem:[#allocation2] sm:$0xff]
      %v696 = vld [vmem:[#allocation2 + $0x8] sm:$0xff]
      %v697 = vld [vmem:[%s636] sm:$0x1]
      %v698 = vmul.f32 %v697, -1e+30
      %v699 = vld [vmem:[%s639] sm:$0x1]
      %v700 = vld [vmem:[%s642] sm:$0x1]
      %vm701 = vcmask 130048
      %v702 = vsel %vm701, %v695, 0.0
      %703 = vadd.xlane.f32.xlu0 %v702
      %v704 = vpop.xlane.xlu0 %703
      %v705 = vsel %vm701, %v696, 0.0
      %706 = vadd.xlane.f32.xlu0 %v705
      %v707 = vpop.xlane.xlu0 %706
      %v708 = vrcp.pop 16.0
      %v709 = vmul.f32 %v704, %v708
      %v710 = vmul.f32 %v707, %v708
      %v711 = vsub.f32 %v695, %v709
      %v712 = vsub.f32 %v696, %v710
      %v713 = vmul.f32 %v711, %v711
      %v714 = vmul.f32 %v712, %v712
      %v715 = vsel %vm701, %v713, 0.0
      %716 = vadd.xlane.f32.xlu0 %v715
      %v717 = vpop.xlane.xlu0 %716
      %v718 = vsel %vm701, %v714, 0.0
      %719 = vadd.xlane.f32.xlu0 %v718
      %v720 = vpop.xlane.xlu0 %719
      %v721 = vmul.f32 %v717, %v708
      %v722 = vmul.f32 %v720, %v708
      %v723 = vadd.f32 %v721, 1e-05
      %v724 = vadd.f32 %v722, 1e-05
      %v725 = vrsqrt.pop %v723
      %v726 = vrsqrt.pop %v724
      %v727 = vmul.f32 %v711, %v725
      %v728 = vmul.f32 %v712, %v726
      %v730 = vlaneseq
      %v731 = vshrl.u32 %v730, 7
      %v732 = vsub.s32 0, %v731
      %v733 = vrot.slane %v699, %v732
      %v735 = vmul.f32 %v727, %v733
      %v736 = vmul.f32 %v728, %v733
      %v738 = vlaneseq
      %v739 = vshrl.u32 %v738, 7
      %v740 = vsub.s32 0, %v739
      %v741 = vrot.slane %v700, %v740
      %v743 = vadd.f32 %v735, %v741
      %v744 = vadd.f32 %v736, %v741
      %v745 = vld [vmem:[%s647] sm:$0xff]
      %v746 = vld [vmem:[%s647 + $0x8] sm:$0xff]
      %v747 = vld [vmem:[%s650] sm:$0x1]
      %v749 = vlaneseq
      %v750 = vshrl.u32 %v749, 7
      %v751 = vsub.s32 0, %v750
      %v752 = vrot.slane %v747, %v751
      %v755 = vsel %vm701, %v743, 0
      %v758 = vsel %vm701, %v744, 0
      %760 = vmatprep.subr.mxu0 0.0
      %761 = vmatpush1.msra.mxu0 %v745
      %762 = vmatprep.subr.mxu0 0.0
      %763 = vmatpush1.msra.mxu0 %v746
      %764 = vmatprep.subr.mxu0 0.0
      %765 = vmatpush1.msra.mxu0 0.0
      %766 = vmatprep.subr.mxu0 0.0
      %767 = vmatpush1.msra.mxu0 0.0
      %768 = vmatprep.subr.mxu0 0.0
      %769 = vmatpush1.msra.mxu0 0.0
      %770 = vmatprep.subr.mxu0 0.0
      %771 = vmatpush1.msra.mxu0 0.0
      %772 = vmatprep.subr.mxu0 0.0
      %773 = vmatpush1.msra.mxu0 0.0
      %774 = vmatprep.subr.mxu0 0.0
      %775 = vmatpush1.msra.mxu0 0.0
      %776 = vmatprep.subr.mxu0 0.0
      %777 = vmatpush1.msra.mxu0 0.0
      %778 = vmatprep.subr.mxu0 0.0
      %779 = vmatpush1.msra.mxu0 0.0
      %780 = vmatprep.subr.mxu0 0.0
      %781 = vmatpush1.msra.mxu0 0.0
      %782 = vmatprep.subr.mxu0 0.0
      %783 = vmatpush1.msra.mxu0 0.0
      %784 = vmatprep.subr.mxu0 0.0
      %785 = vmatpush1.msra.mxu0 0.0
      %786 = vmatprep.subr.mxu0 0.0
      %787 = vmatpush1.msra.mxu0 0.0
      %788 = vmatprep.subr.mxu0 0.0
      %789 = vmatpush1.msra.mxu0 0.0
      %790 = vmatprep.subr.mxu0 0.0
      %791 = vmatpush1.msra.mxu0 0.0
      %792 = vmatprep.subr.mxu0 0.0
      %793 = vmatpush1.msra.mxu0 0.0
      %794 = vmatprep.subr.mxu0 0.0
      %795 = vmatpush1.msra.mxu0 0.0
      %796 = vmatprep.subr.mxu0 0.0
      %797 = vmatpush1.msra.mxu0 0.0
      %798 = vmatprep.subr.mxu0 0.0
      %799 = vmatpush1.msra.mxu0 0.0
      %800 = vmatprep.subr.mxu0 0.0
      %801 = vmatpush1.msra.mxu0 0.0
      %802 = vmatprep.subr.mxu0 0.0
      %803 = vmatpush1.msra.mxu0 0.0
      %804 = vmatprep.subr.mxu0 0.0
      %805 = vmatpush1.msra.mxu0 0.0
      %806 = vmatprep.subr.mxu0 0.0
      %807 = vmatpush1.msra.mxu0 0.0
      %808 = vmatprep.subr.mxu0 0.0
      %809 = vmatpush1.msra.mxu0 0.0
      %810 = vmatprep.subr.mxu0 0.0
      %811 = vmatpush1.msra.mxu0 0.0
      %812 = vmatprep.subr.mxu0 0.0
      %813 = vmatpush1.msra.mxu0 0.0
      %814 = vmatprep.subr.mxu0 0.0
      %815 = vmatpush1.msra.mxu0 0.0
      %816 = vmatprep.subr.mxu0 0.0
      %817 = vmatpush1.msra.mxu0 0.0
      %818 = vmatprep.subr.mxu0 0.0
      %819 = vmatpush1.msra.mxu0 0.0
      %820 = vmatprep.subr.mxu0 0.0
      %821 = vmatpush1.msra.mxu0 0.0
      %822 = vmatprep.subr.mxu0 0.0
      %823 = vmatpush1.msra.mxu0 0.0
      %824 = vmatprep.mubr.f32.mxu0 0.0
      %825 = vmatmul.mubr.f32.gmra.mrb[0].mxu0 %v755
      %v826 = vpop.f32.mrb[0].mxu0
      %v827 = vadd.f32 %v752, %v826
      %v828 = vpop.f32.mrb[0].mxu0
      %829 = vmatprep.mubr.f32.mxu0 0.0
      %830 = vmatmul.mubr.f32.gmra.mrb[0].mxu0 %v758
      %v831 = vpop.f32.mrb[0].mxu0
      %v832 = vadd.f32 %v752, %v831
      %v833 = vpop.f32.mrb[0].mxu0
      %834 = vdwg.mxu0
      %837 = vrot.lane.b32.xlu0 %v827, 112
      %v838 = vpop.permute.xlu0 %837
      %839 = vrot.lane.b32.xlu0 %v832, 112
      %v840 = vpop.permute.xlu0 %839
      %v841 = vsel %vm701, %v827, 0
      %v843 = vsel %vm701, %v832, 0
      %v845 = vsel %vm701, %v838, 0
      %v847 = vsel %vm701, %v840, 0
      %849 = vmatprep.subr.mxu0 0.0
      %850 = vmatpush1.xpose.msra.mxu0 %v845
      %851 = vmatprep.subr.mxu0 0.0
      %852 = vmatpush1.xpose.msra.mxu0 %v847
      %853 = vmatprep.subr.mxu0 0.0
      %854 = vmatpush1.xpose.msra.mxu0 0.0
      %855 = vmatprep.subr.mxu0 0.0
      %856 = vmatpush1.xpose.msra.mxu0 0.0
      %857 = vmatprep.subr.mxu0 0.0
      %858 = vmatpush1.xpose.msra.mxu0 0.0
      %859 = vmatprep.subr.mxu0 0.0
      %860 = vmatpush1.xpose.msra.mxu0 0.0
      %861 = vmatprep.subr.mxu0 0.0
      %862 = vmatpush1.xpose.msra.mxu0 0.0
      %863 = vmatprep.subr.mxu0 0.0
      %864 = vmatpush1.xpose.msra.mxu0 0.0
      %865 = vmatprep.subr.mxu0 0.0
      %866 = vmatpush1.xpose.msra.mxu0 0.0
      %867 = vmatprep.subr.mxu0 0.0
      %868 = vmatpush1.xpose.msra.mxu0 0.0
      %869 = vmatprep.subr.mxu0 0.0
      %870 = vmatpush1.xpose.msra.mxu0 0.0
      %871 = vmatprep.subr.mxu0 0.0
      %872 = vmatpush1.xpose.msra.mxu0 0.0
      %873 = vmatprep.subr.mxu0 0.0
      %874 = vmatpush1.xpose.msra.mxu0 0.0
      %875 = vmatprep.subr.mxu0 0.0
      %876 = vmatpush1.xpose.msra.mxu0 0.0
      %877 = vmatprep.subr.mxu0 0.0
      %878 = vmatpush1.xpose.msra.mxu0 0.0
      %879 = vmatprep.subr.mxu0 0.0
      %880 = vmatpush1.xpose.msra.mxu0 0.0
      %881 = vmatprep.subr.mxu0 0.0
      %882 = vmatpush1.xpose.msra.mxu0 0.0
      %883 = vmatprep.subr.mxu0 0.0
      %884 = vmatpush1.xpose.msra.mxu0 0.0
      %885 = vmatprep.subr.mxu0 0.0
      %886 = vmatpush1.xpose.msra.mxu0 0.0
      %887 = vmatprep.subr.mxu0 0.0
      %888 = vmatpush1.xpose.msra.mxu0 0.0
      %889 = vmatprep.subr.mxu0 0.0
      %890 = vmatpush1.xpose.msra.mxu0 0.0
      %891 = vmatprep.subr.mxu0 0.0
      %892 = vmatpush1.xpose.msra.mxu0 0.0
      %893 = vmatprep.subr.mxu0 0.0
      %894 = vmatpush1.xpose.msra.mxu0 0.0
      %895 = vmatprep.subr.mxu0 0.0
      %896 = vmatpush1.xpose.msra.mxu0 0.0
      %897 = vmatprep.subr.mxu0 0.0
      %898 = vmatpush1.xpose.msra.mxu0 0.0
      %899 = vmatprep.subr.mxu0 0.0
      %900 = vmatpush1.xpose.msra.mxu0 0.0
      %901 = vmatprep.subr.mxu0 0.0
      %902 = vmatpush1.xpose.msra.mxu0 0.0
      %903 = vmatprep.subr.mxu0 0.0
      %904 = vmatpush1.xpose.msra.mxu0 0.0
      %905 = vmatprep.subr.mxu0 0.0
      %906 = vmatpush1.xpose.msra.mxu0 0.0
      %907 = vmatprep.subr.mxu0 0.0
      %908 = vmatpush1.xpose.msra.mxu0 0.0
      %909 = vmatprep.subr.mxu0 0.0
      %910 = vmatpush1.xpose.msra.mxu0 0.0
      %911 = vmatprep.subr.mxu0 0.0
      %912 = vmatpush1.xpose.msra.mxu0 0.0
      %913 = vmatprep.mubr.f32.mxu0 0.0
      %914 = vmatmul.mubr.f32.gmra.mrb[0].mxu0 %v841
      %v915 = vpop.f32.mrb[0].mxu0
      %v916 = vadd.f32 0.0, %v915
      %v917 = vpop.f32.mrb[0].mxu0
      %918 = vmatprep.mubr.f32.mxu0 0.0
      %919 = vmatmul.mubr.f32.gmra.mrb[0].mxu0 %v843
      %v920 = vpop.f32.mrb[0].mxu0
      %v921 = vadd.f32 0.0, %v920
      %v922 = vpop.f32.mrb[0].mxu0
      %923 = vdwg.mxu0
      %v924 = vmul.f32 %v916, 0.25
      %v925 = vmul.f32 %v921, 0.25
      %v927 = vlaneseq
      %v928 = vshrl.u32 %v927, 7
      %v929 = vsub.s32 0, %v928
      %v930 = vrot.slane %v698, %v929
      %v932 = vadd.f32 %v924, %v930
      %v933 = vadd.f32 %v925, %v930
      %v934 = vsel %vm701, %v932, -inf
      %935 = vmax.xlane.f32.xlu0 %v934
      %v936 = vpop.xlane.xlu0 %935
      %v937 = vsel %vm701, %v933, -inf
      %938 = vmax.xlane.f32.xlu0 %v937
      %v939 = vpop.xlane.xlu0 %938
      %v940 = vsub.f32 %v932, %v936
      %v941 = vsub.f32 %v933, %v939
      %v942 = vmul.f32 %v940, 1.442695
      %v943 = vpow.pop %v942
      %v944 = vmul.f32 %v941, 1.442695
      %v945 = vpow.pop %v944
      %v946 = vsel %vm701, %v943, 0.0
      %947 = vadd.xlane.f32.xlu0 %v946
      %v948 = vpop.xlane.xlu0 %947
      %v949 = vsel %vm701, %v945, 0.0
      %950 = vadd.xlane.f32.xlu0 %v949
      %v951 = vpop.xlane.xlu0 %950
      %v952 = vrcp.pop %v948
      %v953 = vrcp.pop %v951
      %v954 = vmul.f32 %v943, %v952
      %v955 = vmul.f32 %v945, %v953
      %956 = vrot.lane.b32.xlu0 %v827, 96
      %v957 = vpop.permute.xlu0 %956
      %958 = vrot.lane.b32.xlu0 %v832, 96
      %v959 = vpop.permute.xlu0 %958
      %v963 = vsel %vm701, %v954, 0
      %v966 = vsel %vm701, %v955, 0
      %968 = vmatprep.subr.mxu0 0.0
      %969 = vmatpush1.msra.mxu0 %v957
      %970 = vmatprep.subr.mxu0 0.0
      %971 = vmatpush1.msra.mxu0 %v959
      %972 = vmatprep.subr.mxu0 0.0
      %973 = vmatpush1.msra.mxu0 0.0
      %974 = vmatprep.subr.mxu0 0.0
      %975 = vmatpush1.msra.mxu0 0.0
      %976 = vmatprep.subr.mxu0 0.0
      %977 = vmatpush1.msra.mxu0 0.0
      %978 = vmatprep.subr.mxu0 0.0
      %979 = vmatpush1.msra.mxu0 0.0
      %980 = vmatprep.subr.mxu0 0.0
      %981 = vmatpush1.msra.mxu0 0.0
      %982 = vmatprep.subr.mxu0 0.0
      %983 = vmatpush1.msra.mxu0 0.0
      %984 = vmatprep.subr.mxu0 0.0
      %985 = vmatpush1.msra.mxu0 0.0
      %986 = vmatprep.subr.mxu0 0.0
      %987 = vmatpush1.msra.mxu0 0.0
      %988 = vmatprep.subr.mxu0 0.0
      %989 = vmatpush1.msra.mxu0 0.0
      %990 = vmatprep.subr.mxu0 0.0
      %991 = vmatpush1.msra.mxu0 0.0
      %992 = vmatprep.subr.mxu0 0.0
      %993 = vmatpush1.msra.mxu0 0.0
      %994 = vmatprep.subr.mxu0 0.0
      %995 = vmatpush1.msra.mxu0 0.0
      %996 = vmatprep.subr.mxu0 0.0
      %997 = vmatpush1.msra.mxu0 0.0
      %998 = vmatprep.subr.mxu0 0.0
      %999 = vmatpush1.msra.mxu0 0.0
      %1000 = vmatprep.subr.mxu0 0.0
      %1001 = vmatpush1.msra.mxu0 0.0
      %1002 = vmatprep.subr.mxu0 0.0
      %1003 = vmatpush1.msra.mxu0 0.0
      %1004 = vmatprep.subr.mxu0 0.0
      %1005 = vmatpush1.msra.mxu0 0.0
      %1006 = vmatprep.subr.mxu0 0.0
      %1007 = vmatpush1.msra.mxu0 0.0
      %1008 = vmatprep.subr.mxu0 0.0
      %1009 = vmatpush1.msra.mxu0 0.0
      %1010 = vmatprep.subr.mxu0 0.0
      %1011 = vmatpush1.msra.mxu0 0.0
      %1012 = vmatprep.subr.mxu0 0.0
      %1013 = vmatpush1.msra.mxu0 0.0
      %1014 = vmatprep.subr.mxu0 0.0
      %1015 = vmatpush1.msra.mxu0 0.0
      %1016 = vmatprep.subr.mxu0 0.0
      %1017 = vmatpush1.msra.mxu0 0.0
      %1018 = vmatprep.subr.mxu0 0.0
      %1019 = vmatpush1.msra.mxu0 0.0
      %1020 = vmatprep.subr.mxu0 0.0
      %1021 = vmatpush1.msra.mxu0 0.0
      %1022 = vmatprep.subr.mxu0 0.0
      %1023 = vmatpush1.msra.mxu0 0.0
      %1024 = vmatprep.subr.mxu0 0.0
      %1025 = vmatpush1.msra.mxu0 0.0
      %1026 = vmatprep.subr.mxu0 0.0
      %1027 = vmatpush1.msra.mxu0 0.0
      %1028 = vmatprep.subr.mxu0 0.0
      %1029 = vmatpush1.msra.mxu0 0.0
      %1030 = vmatprep.subr.mxu0 0.0
      %1031 = vmatpush1.msra.mxu0 0.0
      %1032 = vmatprep.mubr.f32.mxu0 0.0
      %1033 = vmatmul.mubr.f32.gmra.mrb[0].mxu0 %v963
      %v1034 = vpop.f32.mrb[0].mxu0
      %v1035 = vadd.f32 0.0, %v1034
      %v1036 = vpop.f32.mrb[0].mxu0
      %1037 = vmatprep.mubr.f32.mxu0 0.0
      %1038 = vmatmul.mubr.f32.gmra.mrb[0].mxu0 %v966
      %v1039 = vpop.f32.mrb[0].mxu0
      %v1040 = vadd.f32 0.0, %v1039
      %v1041 = vpop.f32.mrb[0].mxu0
      %1042 = vdwg.mxu0
      %v1043 = vld [vmem:[%s655] sm:$0xff]
      %v1044 = vld [vmem:[%s655 + $0x8] sm:$0xff]
      %v1045 = vld [vmem:[%s658] sm:$0x1]
      %v1047 = vlaneseq
      %v1048 = vshrl.u32 %v1047, 7
      %v1049 = vsub.s32 0, %v1048
      %v1050 = vrot.slane %v1045, %v1049
      %v1053 = vsel %vm701, %v1035, 0
      %v1056 = vsel %vm701, %v1040, 0
      %1058 = vmatprep.subr.mxu0 0.0
      %1059 = vmatpush1.msra.mxu0 %v1043
      %1060 = vmatprep.subr.mxu0 0.0
      %1061 = vmatpush1.msra.mxu0 %v1044
      %1062 = vmatprep.subr.mxu0 0.0
      %1063 = vmatpush1.msra.mxu0 0.0
      %1064 = vmatprep.subr.mxu0 0.0
      %1065 = vmatpush1.msra.mxu0 0.0
      %1066 = vmatprep.subr.mxu0 0.0
      %1067 = vmatpush1.msra.mxu0 0.0
      %1068 = vmatprep.subr.mxu0 0.0
      %1069 = vmatpush1.msra.mxu0 0.0
      %1070 = vmatprep.subr.mxu0 0.0
      %1071 = vmatpush1.msra.mxu0 0.0
      %1072 = vmatprep.subr.mxu0 0.0
      %1073 = vmatpush1.msra.mxu0 0.0
      %1074 = vmatprep.subr.mxu0 0.0
      %1075 = vmatpush1.msra.mxu0 0.0
      %1076 = vmatprep.subr.mxu0 0.0
      %1077 = vmatpush1.msra.mxu0 0.0
      %1078 = vmatprep.subr.mxu0 0.0
      %1079 = vmatpush1.msra.mxu0 0.0
      %1080 = vmatprep.subr.mxu0 0.0
      %1081 = vmatpush1.msra.mxu0 0.0
      %1082 = vmatprep.subr.mxu0 0.0
      %1083 = vmatpush1.msra.mxu0 0.0
      %1084 = vmatprep.subr.mxu0 0.0
      %1085 = vmatpush1.msra.mxu0 0.0
      %1086 = vmatprep.subr.mxu0 0.0
      %1087 = vmatpush1.msra.mxu0 0.0
      %1088 = vmatprep.subr.mxu0 0.0
      %1089 = vmatpush1.msra.mxu0 0.0
      %1090 = vmatprep.subr.mxu0 0.0
      %1091 = vmatpush1.msra.mxu0 0.0
      %1092 = vmatprep.subr.mxu0 0.0
      %1093 = vmatpush1.msra.mxu0 0.0
      %1094 = vmatprep.subr.mxu0 0.0
      %1095 = vmatpush1.msra.mxu0 0.0
      %1096 = vmatprep.subr.mxu0 0.0
      %1097 = vmatpush1.msra.mxu0 0.0
      %1098 = vmatprep.subr.mxu0 0.0
      %1099 = vmatpush1.msra.mxu0 0.0
      %1100 = vmatprep.subr.mxu0 0.0
      %1101 = vmatpush1.msra.mxu0 0.0
      %1102 = vmatprep.subr.mxu0 0.0
      %1103 = vmatpush1.msra.mxu0 0.0
      %1104 = vmatprep.subr.mxu0 0.0
      %1105 = vmatpush1.msra.mxu0 0.0
      %1106 = vmatprep.subr.mxu0 0.0
      %1107 = vmatpush1.msra.mxu0 0.0
      %1108 = vmatprep.subr.mxu0 0.0
      %1109 = vmatpush1.msra.mxu0 0.0
      %1110 = vmatprep.subr.mxu0 0.0
      %1111 = vmatpush1.msra.mxu0 0.0
      %1112 = vmatprep.subr.mxu0 0.0
      %1113 = vmatpush1.msra.mxu0 0.0
      %1114 = vmatprep.subr.mxu0 0.0
      %1115 = vmatpush1.msra.mxu0 0.0
      %1116 = vmatprep.subr.mxu0 0.0
      %1117 = vmatpush1.msra.mxu0 0.0
      %1118 = vmatprep.subr.mxu0 0.0
      %1119 = vmatpush1.msra.mxu0 0.0
      %1120 = vmatprep.subr.mxu0 0.0
      %1121 = vmatpush1.msra.mxu0 0.0
      %1122 = vmatprep.mubr.f32.mxu0 0.0
      %1123 = vmatmul.mubr.f32.gmra.mrb[0].mxu0 %v1053
      %v1124 = vpop.f32.mrb[0].mxu0
      %v1125 = vadd.f32 %v1050, %v1124
      %v1126 = vpop.f32.mrb[0].mxu0
      %1127 = vmatprep.mubr.f32.mxu0 0.0
      %1128 = vmatmul.mubr.f32.gmra.mrb[0].mxu0 %v1056
      %v1129 = vpop.f32.mrb[0].mxu0
      %v1130 = vadd.f32 %v1050, %v1129
      %v1131 = vpop.f32.mrb[0].mxu0
      %1132 = vdwg.mxu0
      %v1133 = vadd.f32 %v695, %v1125
      %v1134 = vadd.f32 %v696, %v1130
      %v1135 = vld [vmem:[%s661] sm:$0x1]
      %v1136 = vld [vmem:[%s664] sm:$0x1]
      %v1137 = vsel %vm701, %v1133, 0.0
      %1138 = vadd.xlane.f32.xlu0 %v1137
      %v1139 = vpop.xlane.xlu0 %1138
      %v1140 = vsel %vm701, %v1134, 0.0
      %1141 = vadd.xlane.f32.xlu0 %v1140
      %v1142 = vpop.xlane.xlu0 %1141
      %v1143 = vmul.f32 %v1139, %v708
      %v1144 = vmul.f32 %v1142, %v708
      %v1145 = vsub.f32 %v1133, %v1143
      %v1146 = vsub.f32 %v1134, %v1144
      %v1147 = vmul.f32 %v1145, %v1145
      %v1148 = vmul.f32 %v1146, %v1146
      %v1149 = vsel %vm701, %v1147, 0.0
      %1150 = vadd.xlane.f32.xlu0 %v1149
      %v1151 = vpop.xlane.xlu0 %1150
      %v1152 = vsel %vm701, %v1148, 0.0
      %1153 = vadd.xlane.f32.xlu0 %v1152
      %v1154 = vpop.xlane.xlu0 %1153
      %v1155 = vmul.f32 %v1151, %v708
      %v1156 = vmul.f32 %v1154, %v708
      %v1157 = vadd.f32 %v1155, 1e-05
      %v1158 = vadd.f32 %v1156, 1e-05
      %v1159 = vrsqrt.pop %v1157
      %v1160 = vrsqrt.pop %v1158
      %v1161 = vmul.f32 %v1145, %v1159
      %v1162 = vmul.f32 %v1146, %v1160
      %v1164 = vlaneseq
      %v1165 = vshrl.u32 %v1164, 7
      %v1166 = vsub.s32 0, %v1165
      %v1167 = vrot.slane %v1135, %v1166
      %v1169 = vmul.f32 %v1161, %v1167
      %v1170 = vmul.f32 %v1162, %v1167
      %v1172 = vlaneseq
      %v1173 = vshrl.u32 %v1172, 7
      %v1174 = vsub.s32 0, %v1173
      %v1175 = vrot.slane %v1136, %v1174
      %v1177 = vadd.f32 %v1169, %v1175
      %v1178 = vadd.f32 %v1170, %v1175
      %v1179 = vld [vmem:[%s669] sm:$0xff]
      %v1180 = vld [vmem:[%s669 + $0x8] sm:$0xff]
      %v1181 = vld [vmem:[%s672] sm:$0x1]
      %v1183 = vlaneseq
      %v1184 = vshrl.u32 %v1183, 7
      %v1185 = vsub.s32 0, %v1184
      %v1186 = vrot.slane %v1181, %v1185
      %v1189 = vsel %vm701, %v1177, 0
      %v1192 = vsel %vm701, %v1178, 0
      %1194 = vmatprep.subr.mxu0 0.0
      %1195 = vmatpush1.msra.mxu0 %v1179
      %1196 = vmatprep.subr.mxu0 0.0
      %1197 = vmatpush1.msra.mxu0 %v1180
      %1198 = vmatprep.subr.mxu0 0.0
      %1199 = vmatpush1.msra.mxu0 0.0
      %1200 = vmatprep.subr.mxu0 0.0
      %1201 = vmatpush1.msra.mxu0 0.0
      %1202 = vmatprep.subr.mxu0 0.0
      %1203 = vmatpush1.msra.mxu0 0.0
      %1204 = vmatprep.subr.mxu0 0.0
      %1205 = vmatpush1.msra.mxu0 0.0
      %1206 = vmatprep.subr.mxu0 0.0
      %1207 = vmatpush1.msra.mxu0 0.0
      %1208 = vmatprep.subr.mxu0 0.0
      %1209 = vmatpush1.msra.mxu0 0.0
      %1210 = vmatprep.subr.mxu0 0.0
      %1211 = vmatpush1.msra.mxu0 0.0
      %1212 = vmatprep.subr.mxu0 0.0
      %1213 = vmatpush1.msra.mxu0 0.0
      %1214 = vmatprep.subr.mxu0 0.0
      %1215 = vmatpush1.msra.mxu0 0.0
      %1216 = vmatprep.subr.mxu0 0.0
      %1217 = vmatpush1.msra.mxu0 0.0
      %1218 = vmatprep.subr.mxu0 0.0
      %1219 = vmatpush1.msra.mxu0 0.0
      %1220 = vmatprep.subr.mxu0 0.0
      %1221 = vmatpush1.msra.mxu0 0.0
      %1222 = vmatprep.subr.mxu0 0.0
      %1223 = vmatpush1.msra.mxu0 0.0
      %1224 = vmatprep.subr.mxu0 0.0
      %1225 = vmatpush1.msra.mxu0 0.0
      %1226 = vmatprep.subr.mxu0 0.0
      %1227 = vmatpush1.msra.mxu0 0.0
      %1228 = vmatprep.subr.mxu0 0.0
      %1229 = vmatpush1.msra.mxu0 0.0
      %1230 = vmatprep.subr.mxu0 0.0
      %1231 = vmatpush1.msra.mxu0 0.0
      %1232 = vmatprep.subr.mxu0 0.0
      %1233 = vmatpush1.msra.mxu0 0.0
      %1234 = vmatprep.subr.mxu0 0.0
      %1235 = vmatpush1.msra.mxu0 0.0
      %1236 = vmatprep.subr.mxu0 0.0
      %1237 = vmatpush1.msra.mxu0 0.0
      %1238 = vmatprep.subr.mxu0 0.0
      %1239 = vmatpush1.msra.mxu0 0.0
      %1240 = vmatprep.subr.mxu0 0.0
      %1241 = vmatpush1.msra.mxu0 0.0
      %1242 = vmatprep.subr.mxu0 0.0
      %1243 = vmatpush1.msra.mxu0 0.0
      %1244 = vmatprep.subr.mxu0 0.0
      %1245 = vmatpush1.msra.mxu0 0.0
      %1246 = vmatprep.subr.mxu0 0.0
      %1247 = vmatpush1.msra.mxu0 0.0
      %1248 = vmatprep.subr.mxu0 0.0
      %1249 = vmatpush1.msra.mxu0 0.0
      %1250 = vmatprep.subr.mxu0 0.0
      %1251 = vmatpush1.msra.mxu0 0.0
      %1252 = vmatprep.subr.mxu0 0.0
      %1253 = vmatpush1.msra.mxu0 0.0
      %1254 = vmatprep.subr.mxu0 0.0
      %1255 = vmatpush1.msra.mxu0 0.0
      %1256 = vmatprep.subr.mxu0 0.0
      %1257 = vmatpush1.msra.mxu0 0.0
      %1258 = vmatprep.mubr.f32.mxu0 0.0
      %1259 = vmatmul.mubr.f32.gmra.mrb[0].mxu0 %v1189
      %v1260 = vpop.f32.mrb[0].mxu0
      %v1261 = vadd.f32 %v1186, %v1260
      %v1262 = vpop.f32.mrb[0].mxu0
      %1263 = vmatprep.mubr.f32.mxu0 0.0
      %1264 = vmatmul.mubr.f32.gmra.mrb[0].mxu0 %v1192
      %v1265 = vpop.f32.mrb[0].mxu0
      %v1266 = vadd.f32 %v1186, %v1265
      %v1267 = vpop.f32.mrb[0].mxu0
      %1268 = vdwg.mxu0
      %v1269 = vmul.f32 %v1261, 1.702
      %v1270 = vmul.f32 %v1266, 1.702
      %v1271 = vxor.u32 %v1269, 2147483648
      %v1272 = vxor.u32 %v1270, 2147483648
      %v1273 = vmul.f32 %v1271, 1.442695
      %v1274 = vpow.pop %v1273
      %v1275 = vmul.f32 %v1272, 1.442695
      %v1276 = vpow.pop %v1275
      %v1277 = vadd.f32 %v1274, 1.0
      %v1278 = vadd.f32 %v1276, 1.0
      %v1279 = vrcp.pop %v1277
      %v1280 = vmul.f32 1.0, %v1279
      %v1281 = vrcp.pop %v1278
      %v1282 = vmul.f32 1.0, %v1281
      %v1283 = vmul.f32 %v1261, %v1280
      %v1284 = vmul.f32 %v1266, %v1282
      %v1285 = vld [vmem:[%s677] sm:$0xff]
      %v1286 = vld [vmem:[%s677 + $0x8] sm:$0xff]
      %v1287 = vld [vmem:[%s677 + $0x10] sm:$0xff]
      %v1288 = vld [vmem:[%s677 + $0x18] sm:$0xff]
      %v1289 = vld [vmem:[%s677 + $0x20] sm:$0xff]
      %v1290 = vld [vmem:[%s677 + $0x28] sm:$0xff]
      %v1291 = vld [vmem:[%s677 + $0x30] sm:$0xff]
      %v1292 = vld [vmem:[%s677 + $0x38] sm:$0xff]
      %v1293 = vld [vmem:[%s680] sm:$0x1]
      %v1295 = vlaneseq
      %v1296 = vshrl.u32 %v1295, 7
      %v1297 = vsub.s32 0, %v1296
      %v1298 = vrot.slane %v1293, %v1297
      %vm1300 = vcmask 523264
      %v1302 = vsel %vm1300, %v1283, 0
      %v1305 = vsel %vm1300, %v1284, 0
      %1307 = vmatprep.subr.mxu0 0.0
      %1308 = vmatpush1.msra.mxu0 %v1285
      %1309 = vmatprep.subr.mxu0 0.0
      %1310 = vmatpush1.msra.mxu0 %v1286
      %1311 = vmatprep.subr.mxu0 0.0
      %1312 = vmatpush1.msra.mxu0 %v1287
      %1313 = vmatprep.subr.mxu0 0.0
      %1314 = vmatpush1.msra.mxu0 %v1288
      %1315 = vmatprep.subr.mxu0 0.0
      %1316 = vmatpush1.msra.mxu0 %v1289
      %1317 = vmatprep.subr.mxu0 0.0
      %1318 = vmatpush1.msra.mxu0 %v1290
      %1319 = vmatprep.subr.mxu0 0.0
      %1320 = vmatpush1.msra.mxu0 %v1291
      %1321 = vmatprep.subr.mxu0 0.0
      %1322 = vmatpush1.msra.mxu0 %v1292
      %1323 = vmatprep.subr.mxu0 0.0
      %1324 = vmatpush1.msra.mxu0 0.0
      %1325 = vmatprep.subr.mxu0 0.0
      %1326 = vmatpush1.msra.mxu0 0.0
      %1327 = vmatprep.subr.mxu0 0.0
      %1328 = vmatpush1.msra.mxu0 0.0
      %1329 = vmatprep.subr.mxu0 0.0
      %1330 = vmatpush1.msra.mxu0 0.0
      %1331 = vmatprep.subr.mxu0 0.0
      %1332 = vmatpush1.msra.mxu0 0.0
      %1333 = vmatprep.subr.mxu0 0.0
      %1334 = vmatpush1.msra.mxu0 0.0
      %1335 = vmatprep.subr.mxu0 0.0
      %1336 = vmatpush1.msra.mxu0 0.0
      %1337 = vmatprep.subr.mxu0 0.0
      %1338 = vmatpush1.msra.mxu0 0.0
      %1339 = vmatprep.subr.mxu0 0.0
      %1340 = vmatpush1.msra.mxu0 0.0
      %1341 = vmatprep.subr.mxu0 0.0
      %1342 = vmatpush1.msra.mxu0 0.0
      %1343 = vmatprep.subr.mxu0 0.0
      %1344 = vmatpush1.msra.mxu0 0.0
      %1345 = vmatprep.subr.mxu0 0.0
      %1346 = vmatpush1.msra.mxu0 0.0
      %1347 = vmatprep.subr.mxu0 0.0
      %1348 = vmatpush1.msra.mxu0 0.0
      %1349 = vmatprep.subr.mxu0 0.0
      %1350 = vmatpush1.msra.mxu0 0.0
      %1351 = vmatprep.subr.mxu0 0.0
      %1352 = vmatpush1.msra.mxu0 0.0
      %1353 = vmatprep.subr.mxu0 0.0
      %1354 = vmatpush1.msra.mxu0 0.0
      %1355 = vmatprep.subr.mxu0 0.0
      %1356 = vmatpush1.msra.mxu0 0.0
      %1357 = vmatprep.subr.mxu0 0.0
      %1358 = vmatpush1.msra.mxu0 0.0
      %1359 = vmatprep.subr.mxu0 0.0
      %1360 = vmatpush1.msra.mxu0 0.0
      %1361 = vmatprep.subr.mxu0 0.0
      %1362 = vmatpush1.msra.mxu0 0.0
      %1363 = vmatprep.subr.mxu0 0.0
      %1364 = vmatpush1.msra.mxu0 0.0
      %1365 = vmatprep.subr.mxu0 0.0
      %1366 = vmatpush1.msra.mxu0 0.0
      %1367 = vmatprep.subr.mxu0 0.0
      %1368 = vmatpush1.msra.mxu0 0.0
      %1369 = vmatprep.subr.mxu0 0.0
      %1370 = vmatpush1.msra.mxu0 0.0
      %1371 = vmatprep.mubr.f32.mxu0 0.0
      %1372 = vmatmul.mubr.f32.gmra.mrb[0].mxu0 %v1302
      %v1373 = vpop.f32.mrb[0].mxu0
      %v1374 = vadd.f32 %v1298, %v1373
      %v1375 = vpop.f32.mrb[0].mxu0
      %1376 = vmatprep.mubr.f32.mxu0 0.0
      %1377 = vmatmul.mubr.f32.gmra.mrb[0].mxu0 %v1305
      %v1378 = vpop.f32.mrb[0].mxu0
      %v1379 = vadd.f32 %v1298, %v1378
      %v1380 = vpop.f32.mrb[0].mxu0
      %1381 = vdwg.mxu0
      %v1382 = vadd.f32 %v1133, %v1374
      %v1383 = vadd.f32 %v1134, %v1379
      %1384 = vst.msk [vmem:[#allocation2] sm:$0xff] %vm701, %v1382
      %1385 = vst.msk [vmem:[#allocation2 + $0x8] sm:$0xff] %vm701, %v1383
      %p1386 = scmp.eq.s32.totalorder %s30, 1
      // Predicated region
      $region81: #{transformer_forward.1} parent=75 // pred_check
        %p1387 = pneg %p1386
      $region82: #{transformer_forward.1} parent=75 // pred_check_branch
        %1389 = sbr.rel (%p1387) target = $region84
      $region83: #{transformer_forward.1} parent=75 // pred_region
        %1390 = vst.msk [vmem:[%s685] sm:$0xff] %vm701, %v1382
        %1391 = vst.msk [vmem:[%s685 + $0x8] sm:$0xff] %vm701, %v1383
      $region84: #{transformer_forward.1} parent=75 // pred_fallthru
        _
      %p1392 = scmp.lt.s32.totalorder %s29, 1
      %s1393 = scalar_select %p1392, %s29, 1
      %s1394 = smul.addr %s1393, 2
      %s1395 = smul.addr %s1394, 8
      %s1396 = scalar_lea.vmem %s14, %s1395
      // Predicated region
      $region85: #{transformer_forward.1} parent=75 // pred_check
        %p1397 = pneg %p419
      $region86: #{transformer_forward.1} parent=75 // pred_check_branch
        %1399 = sbr.rel (%p1397) target = $region88
      $region87: #{transformer_forward.1} parent=75 // pred_region
        _
      $region88: #{transformer_forward.1} parent=75 // pred_fallthru
        _
    $region76: #{transformer_forward.1} parent=5 // pred_fallthru
      _
    %p1400 = scmp.le.s32.totalorder 2, %s20
    // Predicated region
    $region89: #{transformer_forward.1} parent=5 // pred_check
      %p1401 = pneg %p1400
    $region90: #{transformer_forward.1} parent=5 // pred_check_branch
      %1403 = sbr.rel (%p1401) target = $region92
    $region91: #{transformer_forward.1} parent=5 // pred_region
      %s1404 = ssub.s32 %s20, 2
      // Predicated region
      $region93: #{transformer_forward.1} parent=91 // pred_check
        %p1405 = pneg %p425
      $region94: #{transformer_forward.1} parent=91 // pred_check_branch
        %1407 = sbr.rel (%p1405) target = $region96
      $region95: #{transformer_forward.1} parent=91 // pred_region
        %p1408 = scmp.lt.s32.totalorder %s31, 1
        %s1409 = scalar_select %p1408, %s31, 1
        %s1410 = smul.addr %s1409, 2
        %s1411 = smul.addr %s1410, 8
        %s1412 = scalar_lea.vmem %s14, %s1411
      $region96: #{transformer_forward.1} parent=91 // pred_fallthru
        _
    $region92: #{transformer_forward.1} parent=5 // pred_fallthru
      _
  $region6: #{transformer_forward.1} parent=0 // loop_footer
    %s24 = sadd.s32 1, %s20
  $region7: #{transformer_forward.1} parent=0 // loop_footer_branch
    %19 = sbr.rel target = $region3
  $region8: #{transformer_forward.1} parent=0 // loop_exit
    _

</llo_original>
